<compile_context>
chip_gen: v5e
topology: v5e:2x2
jax: 0.10.0
libtpu: 0.0.40
codegen_flags: <defaults>
</compile_context>

<pallas_src>
import functools

import jax
import jax.numpy as jnp
from jax.experimental import pallas as pl
from jax.experimental.pallas import tpu as pltpu

LANE = 128          # lane width; pad all feature dims to a multiple of this.
NEG_BIG = -1e30     # finite "minus infinity" baked into padded output-bias cols.


def _round_up(n, m):
    return ((n + m - 1) // m) * m


def _mlp_kernel(num_hidden, *refs):
    # refs = (x_ref, w0, b0, w1, b1, ..., w_out, b_out, out_ref)
    x_ref = refs[0]
    out_ref = refs[-1]
    p = refs[1:-1]

    h = x_ref[...]  # (TB, D_in_pad) bf16

    # Hidden layers: Linear -> ReLU -> Dropout (eval-mode identity).
    # TODO(synk): training-mode dropout not implemented (eval-mode identity).
    for i in range(num_hidden):
        w = p[2 * i][...]       # (K_pad, N_pad) bf16
        b = p[2 * i + 1][...]   # (1, N_pad)     f32
        h = jnp.dot(h.astype(w.dtype), w,
                    preferred_element_type=jnp.float32) + b
        h = jnp.maximum(h, 0.0)

    # Output layer. Padded logit columns get the NEG_BIG baked into the bias,
    # so no in-kernel masking is required and log_softmax over dim=1 is exact.
    wo = p[2 * num_hidden][...]
    bo = p[2 * num_hidden + 1][...]
    z = jnp.dot(h.astype(wo.dtype), wo,
                preferred_element_type=jnp.float32) + bo  # (TB, OUT_PAD) f32

    m = jnp.max(z, axis=1, keepdims=True)
    shifted = z - m
    lse = jnp.log(jnp.sum(jnp.exp(shifted), axis=1, keepdims=True))
    out_ref[...] = (shifted - lse).astype(out_ref.dtype)


def prepare_params(params):
    """One-time preprocessing (call ONCE, outside the hot path).

    params: list of (W, b) with W shaped (in, out) f32, b shaped (1, out) f32.
    Returns (padded_params, d_in, out_dim) where padded weights are bf16 with
    feature dims padded to LANE multiples and the padded columns of the output
    bias are set to NEG_BIG (bakes the log_softmax mask into the bias).
    """
    d_in = params[0][0].shape[0]
    out_dim = params[-1][0].shape[1]
    in_pad = _round_up(d_in, LANE)

    padded = []
    prev_pad = in_pad
    n_layers = len(params)
    for li, (w, b) in enumerate(params):
        fi, fo = w.shape
        fo_pad = _round_up(fo, LANE)
        wp = jnp.zeros((prev_pad, fo_pad), jnp.bfloat16)
        wp = wp.at[:fi, :fo].set(w.astype(jnp.bfloat16))
        fill = NEG_BIG if li == n_layers - 1 else 0.0
        bp = jnp.full((1, fo_pad), fill, jnp.float32)
        bp = bp.at[:, :fo].set(b.reshape(1, fo).astype(jnp.float32))
        padded.append((wp, bp))
        prev_pad = fo_pad
    return padded, d_in, out_dim


def _pick_batch_tile(B, tb_max):
    """Multiple-of-8 batch tile; >= 2 grid steps when the batch allows so the
    'parallel' batch axis can be sharded across both v7x TensorCores."""
    if B <= 8:
        return 8
    half = _round_up((B + 1) // 2, 8)
    return min(tb_max, half)


def mlp_forward(x, prepared, *, tb=512):
    """x: (B, d_in) f32 (or bf16). prepared: output of prepare_params()."""
    padded_params, d_in, out_dim = prepared
    B = x.shape[0]
    in_pad = padded_params[0][0].shape[0]
    out_pad = padded_params[-1][0].shape[1]
    num_hidden = len(padded_params) - 1

    tb_eff = _pick_batch_tile(B, tb)
    b_pad = _round_up(B, tb_eff)
    grid_steps = b_pad // tb_eff

    # Single fused pad + bf16 cast (x and out are the only per-step DMAs).
    xp = jnp.pad(x.astype(jnp.bfloat16),
                 ((0, b_pad - B), (0, in_pad - d_in)))

    flat_params = []
    for w, b in padded_params:
        flat_params.extend((w, b))

    # Advisory cost estimate for XLA scheduling around the custom call.
    flops = 2 * b_pad * sum(int(w.shape[0]) * int(w.shape[1])
                            for w, _ in padded_params)
    param_bytes = sum(w.size * 2 + b.size * 4 for w, b in padded_params)
    bytes_accessed = int(xp.size * 2 + param_bytes + b_pad * out_pad * 4)
    cost = pl.CostEstimate(flops=int(flops),
                           transcendentals=int(b_pad * out_pad),
                           bytes_accessed=bytes_accessed)

    # VMEM budget: resident params (x1 with Buffered(1)) + double-buffered
    # x/out tiles, with headroom; clamp to stay safe on v7x (64 MiB physical).
    io_bytes = 2 * (tb_eff * in_pad * 2 + tb_eff * out_pad * 4)
    vmem_limit = int(min(max(2 * (param_bytes + io_bytes) + (8 << 20),
                             32 << 20), 96 << 20))

    cparams = pltpu.CompilerParams(
        dimension_semantics=("parallel",),
        vmem_limit_bytes=vmem_limit)

    kernel = functools.partial(_mlp_kernel, num_hidden)
    out_shape = jax.ShapeDtypeStruct((b_pad, out_pad), jnp.float32)
    out_specs = pl.BlockSpec((tb_eff, out_pad), lambda i: (i, 0))

    def make_in_specs(single_buffer):
        specs = [pl.BlockSpec((tb_eff, in_pad), lambda i: (i, 0))]
        for w, b in padded_params:
            if single_buffer:
                # Grid-invariant params: single-buffer to halve their VMEM use.
                specs.append(pl.BlockSpec(w.shape, lambda i: (0, 0),
                                          pipeline_mode=pl.Buffered(1)))
                specs.append(pl.BlockSpec(b.shape, lambda i: (0, 0),
                                          pipeline_mode=pl.Buffered(1)))
            else:
                specs.append(pl.BlockSpec(w.shape, lambda i: (0, 0)))
                specs.append(pl.BlockSpec(b.shape, lambda i: (0, 0)))
        return specs

    def run(single_buffer):
        return pl.pallas_call(
            kernel,
            out_shape=out_shape,
            grid=(grid_steps,),
            in_specs=make_in_specs(single_buffer),
            out_specs=out_specs,
            compiler_params=cparams,
            cost_estimate=cost,
        )(xp, *flat_params)

    try:
        out_padded = jax.block_until_ready(run(single_buffer=True))
    except Exception:
        # Fallback if this jax build rejects pipeline_mode single-buffering.
        out_padded = run(single_buffer=False)

    return out_padded[:B, :out_dim]


def init_params(key, input_size, hidden_layers, output_size):
    """PyTorch-nn.Linear-style uniform(-1/sqrt(fan_in), 1/sqrt(fan_in)) init,
    deterministic via PRNGKey splitting. Weights stored as (in, out)."""
    sizes = [input_size] + list(hidden_layers) + [output_size]
    params = []
    for i in range(len(sizes) - 1):
        fan_in, fan_out = sizes[i], sizes[i + 1]
        key, kw, kb = jax.random.split(key, 3)
        bound = 1.0 / jnp.sqrt(jnp.float32(fan_in))
        w = jax.random.uniform(kw, (fan_in, fan_out), jnp.float32, -bound, bound)
        b = jax.random.uniform(kb, (1, fan_out), jnp.float32, -bound, bound)
        params.append((w, b))
    return params


def reference_forward(x, params):
    """Pure-JAX reference mirroring the kernel numerics: bf16 operands,
    f32 accumulation, eval-mode dropout (identity)."""
    h = x
    for w, b in params[:-1]:
        h = jnp.dot(h.astype(jnp.bfloat16), w.astype(jnp.bfloat16),
                    preferred_element_type=jnp.float32) + b
        h = jnp.maximum(h, 0.0)
    w, b = params[-1]
    z = jnp.dot(h.astype(jnp.bfloat16), w.astype(jnp.bfloat16),
                preferred_element_type=jnp.float32) + b
    return jax.nn.log_softmax(z, axis=1)


if __name__ == "__main__":
    key = jax.random.PRNGKey(0)

    batch = 16
    input_size = 32
    hidden_layers = [64, 32]
    output_size = 10

    key, kx = jax.random.split(key)
    x = jax.random.normal(kx, (batch, input_size), jnp.float32)

    params = init_params(key, input_size, hidden_layers, output_size)
    prepared = prepare_params(params)   # one-time padding / bf16 cast / mask bake

    out = mlp_forward(x, prepared)
    out = jax.block_until_ready(out)

    ref = reference_forward(x, params)
    assert out.shape == (batch, output_size)
    assert jnp.allclose(out, ref, atol=1e-3, rtol=1e-3), "mismatch vs reference"

    print("KERNEL_OK")
</pallas_src>

<mosaic_0001>
module attributes {stable_mosaic.version = 11 : i64} {
  func.func @_mlp_kernel(%arg0: i32, %arg1: memref<8x128xbf16, #tpu.memory_space<vmem>>, %arg2: memref<128x128xbf16, #tpu.memory_space<vmem>>, %arg3: memref<1x128xf32, #tpu.memory_space<vmem>>, %arg4: memref<128x128xbf16, #tpu.memory_space<vmem>>, %arg5: memref<1x128xf32, #tpu.memory_space<vmem>>, %arg6: memref<128x128xbf16, #tpu.memory_space<vmem>>, %arg7: memref<1x128xf32, #tpu.memory_space<vmem>>, %arg8: memref<8x128xf32, #tpu.memory_space<vmem>>) attributes {dimension_semantics = [#tpu.dimension_semantics<parallel>], iteration_bounds = array<i64: 2>, scalar_prefetch = 0 : i64, scratch_operands = 0 : i64, tpu.core_type = #tpu.core_type<tc>, window_params = [{transform_indices = @transform_0, window_bounds = array<i64: 8, 128>}, {pipeline_mode = #tpu.pipeline_mode<synchronous>, transform_indices = @transform_1, window_bounds = array<i64: 128, 128>}, {pipeline_mode = #tpu.pipeline_mode<synchronous>, transform_indices = @transform_2, window_bounds = array<i64: 1, 128>}, {pipeline_mode = #tpu.pipeline_mode<synchronous>, transform_indices = @transform_3, window_bounds = array<i64: 128, 128>}, {pipeline_mode = #tpu.pipeline_mode<synchronous>, transform_indices = @transform_4, window_bounds = array<i64: 1, 128>}, {pipeline_mode = #tpu.pipeline_mode<synchronous>, transform_indices = @transform_5, window_bounds = array<i64: 128, 128>}, {pipeline_mode = #tpu.pipeline_mode<synchronous>, transform_indices = @transform_6, window_bounds = array<i64: 1, 128>}, {transform_indices = @transform_7, window_bounds = array<i64: 8, 128>}]} {
    %c0 = arith.constant 0 : index
    %c0_0 = arith.constant 0 : index
    %0 = vector.load %arg1[%c0, %c0_0] : memref<8x128xbf16, #tpu.memory_space<vmem>>, vector<8x128xbf16>
    %c0_1 = arith.constant 0 : index
    %c0_2 = arith.constant 0 : index
    %1 = vector.load %arg2[%c0_1, %c0_2] : memref<128x128xbf16, #tpu.memory_space<vmem>>, vector<128x128xbf16>
    %c0_3 = arith.constant 0 : index
    %c0_4 = arith.constant 0 : index
    %2 = vector.load %arg3[%c0_3, %c0_4] : memref<1x128xf32, #tpu.memory_space<vmem>>, vector<1x128xf32>
    %cst = arith.constant dense<0.000000e+00> : vector<8x128xf32>
    %3 = tpu.matmul %0, %1, %cst {dimension_numbers = #tpu.dot_dimension_numbers<[1], [0], [0], [1], [0, 0, 1, 1], [], []>} : vector<8x128xbf16>, vector<128x128xbf16>, vector<8x128xf32> -> vector<8x128xf32>
    %4 = vector.broadcast %2 : vector<1x128xf32> to vector<8x128xf32>
    %5 = arith.addf %3, %4 : vector<8x128xf32>
    %cst_5 = arith.constant 0.000000e+00 : f32
    %6 = vector.broadcast %cst_5 : f32 to vector<8x128xf32>
    %7 = arith.maximumf %5, %6 : vector<8x128xf32>
    %c0_6 = arith.constant 0 : index
    %c0_7 = arith.constant 0 : index
    %8 = vector.load %arg4[%c0_6, %c0_7] : memref<128x128xbf16, #tpu.memory_space<vmem>>, vector<128x128xbf16>
    %c0_8 = arith.constant 0 : index
    %c0_9 = arith.constant 0 : index
    %9 = vector.load %arg5[%c0_8, %c0_9] : memref<1x128xf32, #tpu.memory_space<vmem>>, vector<1x128xf32>
    %10 = arith.truncf %7 : vector<8x128xf32> to vector<8x128xbf16>
    %cst_10 = arith.constant dense<0.000000e+00> : vector<8x128xf32>
    %11 = tpu.matmul %10, %8, %cst_10 {dimension_numbers = #tpu.dot_dimension_numbers<[1], [0], [0], [1], [0, 0, 1, 1], [], []>} : vector<8x128xbf16>, vector<128x128xbf16>, vector<8x128xf32> -> vector<8x128xf32>
    %12 = vector.broadcast %9 : vector<1x128xf32> to vector<8x128xf32>
    %13 = arith.addf %11, %12 : vector<8x128xf32>
    %cst_11 = arith.constant 0.000000e+00 : f32
    %14 = vector.broadcast %cst_11 : f32 to vector<8x128xf32>
    %15 = arith.maximumf %13, %14 : vector<8x128xf32>
    %c0_12 = arith.constant 0 : index
    %c0_13 = arith.constant 0 : index
    %16 = vector.load %arg6[%c0_12, %c0_13] : memref<128x128xbf16, #tpu.memory_space<vmem>>, vector<128x128xbf16>
    %c0_14 = arith.constant 0 : index
    %c0_15 = arith.constant 0 : index
    %17 = vector.load %arg7[%c0_14, %c0_15] : memref<1x128xf32, #tpu.memory_space<vmem>>, vector<1x128xf32>
    %18 = arith.truncf %15 : vector<8x128xf32> to vector<8x128xbf16>
    %cst_16 = arith.constant dense<0.000000e+00> : vector<8x128xf32>
    %19 = tpu.matmul %18, %16, %cst_16 {dimension_numbers = #tpu.dot_dimension_numbers<[1], [0], [0], [1], [0, 0, 1, 1], [], []>} : vector<8x128xbf16>, vector<128x128xbf16>, vector<8x128xf32> -> vector<8x128xf32>
    %20 = vector.broadcast %17 : vector<1x128xf32> to vector<8x128xf32>
    %21 = arith.addf %19, %20 : vector<8x128xf32>
    %cst_17 = arith.constant dense<0xFF800000> : vector<8xf32>
    %22 = vector.multi_reduction <maximumf>, %21, %cst_17 [1] : vector<8x128xf32> to vector<8xf32>
    %23 = vector.shape_cast %22 : vector<8xf32> to vector<8x1xf32>
    %24 = vector.broadcast %23 : vector<8x1xf32> to vector<8x128xf32>
    %25 = arith.subf %21, %24 : vector<8x128xf32>
    %26 = math.exp %25 : vector<8x128xf32>
    %cst_18 = arith.constant dense<0.000000e+00> : vector<8xf32>
    %27 = vector.multi_reduction <add>, %26, %cst_18 [1] : vector<8x128xf32> to vector<8xf32>
    %28 = vector.shape_cast %27 : vector<8xf32> to vector<8x1xf32>
    %29 = math.log %28 : vector<8x1xf32>
    %30 = vector.broadcast %29 : vector<8x1xf32> to vector<8x128xf32>
    %31 = arith.subf %25, %30 : vector<8x128xf32>
    %c0_19 = arith.constant 0 : index
    %c0_20 = arith.constant 0 : index
    %32 = vector.load %arg8[%c0_19, %c0_20] : memref<8x128xf32, #tpu.memory_space<vmem>>, vector<8x128xf32>
    tpu.vector_store %arg8[%c0_19, %c0_20], %31 {strides = array<i32>} : memref<8x128xf32, #tpu.memory_space<vmem>>, vector<8x128xf32>,
    return
  }
  func.func @transform_0(%arg0: i32) -> (i32, i32) {
    %c0_i32 = arith.constant 0 : i32
    %c0_i32_0 = arith.constant 0 : i32
    return %arg0, %c0_i32 : i32, i32
  }
  func.func @transform_1(%arg0: i32) -> (i32, i32) {
    %c0_i32 = arith.constant 0 : i32
    %c0_i32_0 = arith.constant 0 : i32
    %c0_i32_1 = arith.constant 0 : i32
    return %c0_i32, %c0_i32_0 : i32, i32
  }
  func.func @transform_2(%arg0: i32) -> (i32, i32) {
    %c0_i32 = arith.constant 0 : i32
    %c0_i32_0 = arith.constant 0 : i32
    %c0_i32_1 = arith.constant 0 : i32
    return %c0_i32, %c0_i32_0 : i32, i32
  }
  func.func @transform_3(%arg0: i32) -> (i32, i32) {
    %c0_i32 = arith.constant 0 : i32
    %c0_i32_0 = arith.constant 0 : i32
    %c0_i32_1 = arith.constant 0 : i32
    return %c0_i32, %c0_i32_0 : i32, i32
  }
  func.func @transform_4(%arg0: i32) -> (i32, i32) {
    %c0_i32 = arith.constant 0 : i32
    %c0_i32_0 = arith.constant 0 : i32
    %c0_i32_1 = arith.constant 0 : i32
    return %c0_i32, %c0_i32_0 : i32, i32
  }
  func.func @transform_5(%arg0: i32) -> (i32, i32) {
    %c0_i32 = arith.constant 0 : i32
    %c0_i32_0 = arith.constant 0 : i32
    %c0_i32_1 = arith.constant 0 : i32
    return %c0_i32, %c0_i32_0 : i32, i32
  }
  func.func @transform_6(%arg0: i32) -> (i32, i32) {
    %c0_i32 = arith.constant 0 : i32
    %c0_i32_0 = arith.constant 0 : i32
    %c0_i32_1 = arith.constant 0 : i32
    return %c0_i32, %c0_i32_0 : i32, i32
  }
  func.func @transform_7(%arg0: i32) -> (i32, i32) {
    %c0_i32 = arith.constant 0 : i32
    %c0_i32_0 = arith.constant 0 : i32
    return %arg0, %c0_i32 : i32, i32
  }
}

module attributes {stable_mosaic.version = 11 : i64} {
  func.func @_mlp_kernel(%arg0: i32, %arg1: memref<8x128xbf16, #tpu.memory_space<vmem>>, %arg2: memref<128x128xbf16, #tpu.memory_space<vmem>>, %arg3: memref<1x128xf32, #tpu.memory_space<vmem>>, %arg4: memref<128x128xbf16, #tpu.memory_space<vmem>>, %arg5: memref<1x128xf32, #tpu.memory_space<vmem>>, %arg6: memref<128x128xbf16, #tpu.memory_space<vmem>>, %arg7: memref<1x128xf32, #tpu.memory_space<vmem>>, %arg8: memref<8x128xf32, #tpu.memory_space<vmem>>) attributes {dimension_semantics = [#tpu.dimension_semantics<parallel>], iteration_bounds = array<i64: 2>, scalar_prefetch = 0 : i64, scratch_operands = 0 : i64, tpu.core_type = #tpu.core_type<tc>, window_params = [{transform_indices = @transform_0, window_bounds = array<i64: 8, 128>}, {pipeline_mode = #tpu.pipeline_mode<synchronous>, transform_indices = @transform_1, window_bounds = array<i64: 128, 128>}, {pipeline_mode = #tpu.pipeline_mode<synchronous>, transform_indices = @transform_2, window_bounds = array<i64: 1, 128>}, {pipeline_mode = #tpu.pipeline_mode<synchronous>, transform_indices = @transform_3, window_bounds = array<i64: 128, 128>}, {pipeline_mode = #tpu.pipeline_mode<synchronous>, transform_indices = @transform_4, window_bounds = array<i64: 1, 128>}, {pipeline_mode = #tpu.pipeline_mode<synchronous>, transform_indices = @transform_5, window_bounds = array<i64: 128, 128>}, {pipeline_mode = #tpu.pipeline_mode<synchronous>, transform_indices = @transform_6, window_bounds = array<i64: 1, 128>}, {transform_indices = @transform_7, window_bounds = array<i64: 8, 128>}]} {
    %c0 = arith.constant 0 : index
    %c0_0 = arith.constant 0 : index
    %0 = vector.load %arg1[%c0, %c0_0] : memref<8x128xbf16, #tpu.memory_space<vmem>>, vector<8x128xbf16>
    %c0_1 = arith.constant 0 : index
    %c0_2 = arith.constant 0 : index
    %1 = vector.load %arg2[%c0_1, %c0_2] : memref<128x128xbf16, #tpu.memory_space<vmem>>, vector<128x128xbf16>
    %c0_3 = arith.constant 0 : index
    %c0_4 = arith.constant 0 : index
    %2 = vector.load %arg3[%c0_3, %c0_4] : memref<1x128xf32, #tpu.memory_space<vmem>>, vector<1x128xf32>
    %cst = arith.constant dense<0.000000e+00> : vector<8x128xf32>
    %3 = tpu.matmul %0, %1, %cst {dimension_numbers = #tpu.dot_dimension_numbers<[1], [0], [0], [1], [0, 0, 1, 1], [], []>} : vector<8x128xbf16>, vector<128x128xbf16>, vector<8x128xf32> -> vector<8x128xf32>
    %4 = vector.broadcast %2 : vector<1x128xf32> to vector<8x128xf32>
    %5 = arith.addf %3, %4 : vector<8x128xf32>
    %cst_5 = arith.constant 0.000000e+00 : f32
    %6 = vector.broadcast %cst_5 : f32 to vector<8x128xf32>
    %7 = arith.maximumf %5, %6 : vector<8x128xf32>
    %c0_6 = arith.constant 0 : index
    %c0_7 = arith.constant 0 : index
    %8 = vector.load %arg4[%c0_6, %c0_7] : memref<128x128xbf16, #tpu.memory_space<vmem>>, vector<128x128xbf16>
    %c0_8 = arith.constant 0 : index
    %c0_9 = arith.constant 0 : index
    %9 = vector.load %arg5[%c0_8, %c0_9] : memref<1x128xf32, #tpu.memory_space<vmem>>, vector<1x128xf32>
    %10 = arith.truncf %7 : vector<8x128xf32> to vector<8x128xbf16>
    %cst_10 = arith.constant dense<0.000000e+00> : vector<8x128xf32>
    %11 = tpu.matmul %10, %8, %cst_10 {dimension_numbers = #tpu.dot_dimension_numbers<[1], [0], [0], [1], [0, 0, 1, 1], [], []>} : vector<8x128xbf16>, vector<128x128xbf16>, vector<8x128xf32> -> vector<8x128xf32>
    %12 = vector.broadcast %9 : vector<1x128xf32> to vector<8x128xf32>
    %13 = arith.addf %11, %12 : vector<8x128xf32>
    %cst_11 = arith.constant 0.000000e+00 : f32
    %14 = vector.broadcast %cst_11 : f32 to vector<8x128xf32>
    %15 = arith.maximumf %13, %14 : vector<8x128xf32>
    %c0_12 = arith.constant 0 : index
    %c0_13 = arith.constant 0 : index
    %16 = vector.load %arg6[%c0_12, %c0_13] : memref<128x128xbf16, #tpu.memory_space<vmem>>, vector<128x128xbf16>
    %c0_14 = arith.constant 0 : index
    %c0_15 = arith.constant 0 : index
    %17 = vector.load %arg7[%c0_14, %c0_15] : memref<1x128xf32, #tpu.memory_space<vmem>>, vector<1x128xf32>
    %18 = arith.truncf %15 : vector<8x128xf32> to vector<8x128xbf16>
    %cst_16 = arith.constant dense<0.000000e+00> : vector<8x128xf32>
    %19 = tpu.matmul %18, %16, %cst_16 {dimension_numbers = #tpu.dot_dimension_numbers<[1], [0], [0], [1], [0, 0, 1, 1], [], []>} : vector<8x128xbf16>, vector<128x128xbf16>, vector<8x128xf32> -> vector<8x128xf32>
    %20 = vector.broadcast %17 : vector<1x128xf32> to vector<8x128xf32>
    %21 = arith.addf %19, %20 : vector<8x128xf32>
    %cst_17 = arith.constant dense<0xFF800000> : vector<8xf32>
    %22 = vector.multi_reduction <maximumf>, %21, %cst_17 [1] : vector<8x128xf32> to vector<8xf32>
    %23 = vector.shape_cast %22 : vector<8xf32> to vector<8x1xf32>
    %24 = vector.broadcast %23 : vector<8x1xf32> to vector<8x128xf32>
    %25 = arith.subf %21, %24 : vector<8x128xf32>
    %26 = math.exp %25 : vector<8x128xf32>
    %cst_18 = arith.constant dense<0.000000e+00> : vector<8xf32>
    %27 = vector.multi_reduction <add>, %26, %cst_18 [1] : vector<8x128xf32> to vector<8xf32>
    %28 = vector.shape_cast %27 : vector<8xf32> to vector<8x1xf32>
    %29 = math.log %28 : vector<8x1xf32>
    %30 = vector.broadcast %29 : vector<8x1xf32> to vector<8x128xf32>
    %31 = arith.subf %25, %30 : vector<8x128xf32>
    %c0_19 = arith.constant 0 : index
    %c0_20 = arith.constant 0 : index
    %32 = vector.load %arg8[%c0_19, %c0_20] : memref<8x128xf32, #tpu.memory_space<vmem>>, vector<8x128xf32>
    tpu.vector_store %arg8[%c0_19, %c0_20], %31 {strides = array<i32>} : memref<8x128xf32, #tpu.memory_space<vmem>>, vector<8x128xf32>,
    return
  }
  func.func @transform_0(%arg0: i32) -> (i32, i32) {
    %c0_i32 = arith.constant 0 : i32
    %c0_i32_0 = arith.constant 0 : i32
    return %arg0, %c0_i32 : i32, i32
  }
  func.func @transform_1(%arg0: i32) -> (i32, i32) {
    %c0_i32 = arith.constant 0 : i32
    %c0_i32_0 = arith.constant 0 : i32
    %c0_i32_1 = arith.constant 0 : i32
    return %c0_i32, %c0_i32_0 : i32, i32
  }
  func.func @transform_2(%arg0: i32) -> (i32, i32) {
    %c0_i32 = arith.constant 0 : i32
    %c0_i32_0 = arith.constant 0 : i32
    %c0_i32_1 = arith.constant 0 : i32
    return %c0_i32, %c0_i32_0 : i32, i32
  }
  func.func @transform_3(%arg0: i32) -> (i32, i32) {
    %c0_i32 = arith.constant 0 : i32
    %c0_i32_0 = arith.constant 0 : i32
    %c0_i32_1 = arith.constant 0 : i32
    return %c0_i32, %c0_i32_0 : i32, i32
  }
  func.func @transform_4(%arg0: i32) -> (i32, i32) {
    %c0_i32 = arith.constant 0 : i32
    %c0_i32_0 = arith.constant 0 : i32
    %c0_i32_1 = arith.constant 0 : i32
    return %c0_i32, %c0_i32_0 : i32, i32
  }
  func.func @transform_5(%arg0: i32) -> (i32, i32) {
    %c0_i32 = arith.constant 0 : i32
    %c0_i32_0 = arith.constant 0 : i32
    %c0_i32_1 = arith.constant 0 : i32
    return %c0_i32, %c0_i32_0 : i32, i32
  }
  func.func @transform_6(%arg0: i32) -> (i32, i32) {
    %c0_i32 = arith.constant 0 : i32
    %c0_i32_0 = arith.constant 0 : i32
    %c0_i32_1 = arith.constant 0 : i32
    return %c0_i32, %c0_i32_0 : i32, i32
  }
  func.func @transform_7(%arg0: i32) -> (i32, i32) {
    %c0_i32 = arith.constant 0 : i32
    %c0_i32_0 = arith.constant 0 : i32
    return %arg0, %c0_i32 : i32, i32
  }
}

</mosaic_0001>

<llo_original>
// kernel: tpu_custom_call.1
$region0: #{tpu_custom_call.1}
  #allocation0 [shape = 'u32[]', space=smem, size = 0x4, offset = 0x4, fixed_abs, tag = 'smem constant byte address 0x4 - core index']
  #allocation1 [shape = 'u32[72,128]{1,0:T(1,128)}', space=vmem, size = 0x9000, scoped, tag = 'internal scratch']
  %s0 = inlined_call_operand.hbm [shape: bf16[16,128], index: 0, kind: input, shape index: {}]
  %s1 = inlined_call_operand.hbm [shape: bf16[128,128], index: 1, kind: input, shape index: {}]
  %s2 = inlined_call_operand.vmem [shape: f32[1,128], index: 2, kind: input, shape index: {}]
  %s3 = inlined_call_operand.hbm [shape: bf16[128,128], index: 3, kind: input, shape index: {}]
  %s4 = inlined_call_operand.vmem [shape: f32[1,128], index: 4, kind: input, shape index: {}]
  %s5 = inlined_call_operand.hbm [shape: bf16[128,128], index: 5, kind: input, shape index: {}]
  %s6 = inlined_call_operand.vmem [shape: f32[1,128], index: 6, kind: input, shape index: {}]
  %s7 = inlined_call_operand.hbm [shape: f32[16,128], index: 7, kind: output, shape index: {}]
  %s8 = sld [smem:[#allocation0]]
  $region77: #{tpu_custom_call.1} parent=0
    _
  %s10 = ssub.s32 1, %s8
  %s11 = scalar_select 0, %s10, %s8
  $region1: #{tpu_custom_call.1} parent=0
    #allocation2 [shape = 'u8[4096]{0}', space=vmem, size = 0x1000, scoped, tag = 'input window, operand 0']
    #allocation3 [shape = 's32[2]{0}', space=sflag, size = 0x8, scoped, tag = 'scoped memory for tpu_custom_call.1']
    #allocation4 [shape = 's32[2]{0}', space=sflag, size = 0x8, scoped, tag = 'scoped memory for tpu_custom_call.1']
    #allocation5 [shape = 'u8[32768]{0}', space=vmem, size = 0x8000, scoped, tag = 'input window, operand 1, single buffered']
    #allocation6 [shape = 's32[1]{0}', space=sflag, size = 0x4, scoped, tag = 'scoped memory for tpu_custom_call.1']
    #allocation7 [shape = 'u8[32768]{0}', space=vmem, size = 0x8000, scoped, tag = 'input window, operand 3, single buffered']
    #allocation8 [shape = 'u8[32768]{0}', space=vmem, size = 0x8000, scoped, tag = 'input window, operand 5, single buffered']
    #allocation9 [shape = 's32[1]{0}', space=sflag, size = 0x4, scoped, tag = 'scoped memory for tpu_custom_call.1']
    #allocation10 [shape = 'u8[8192]{0}', space=vmem, size = 0x2000, scoped, tag = 'output window, operand 0']
    %12 = vsyncpa [#allocation3], 0
    %s13 = scalar_lea.sflag [#allocation3], 1
    %14 = vsyncpa %s13, 0
    %15 = vsyncpa [#allocation6], 0
    %16 = vsyncpa [#allocation9], 0
    %17 = vsyncpa [#allocation4], 0
    %s18 = scalar_lea.sflag [#allocation4], 1
    %19 = vsyncpa %s18, 0
    loop: start=0, step=1, limit=4
    $region2: #{tpu_custom_call.1} parent=1 // loop_pre_header
      _
    $region3: #{tpu_custom_call.1} parent=1 // loop_header
      %s21 = sphi 0, %s25
      %p22 = scmp.ge.s32.totalorder %s21, 4
      %s31 = sphi 0, %s33
      %s34 = sphi 0, %s31
      %s35 = sphi 0, %s34
      %s51 = sphi 0, %s35
      %s55 = sphi 0, %s55
      %s57 = sphi 0, %s55
      %s58 = sphi 0, %s57
      %s72 = sphi 0, %s58
      %s76 = sphi 0, %s76
      %s78 = sphi 0, %s76
      %s79 = sphi 0, %s78
      %s93 = sphi 0, %s79
      %s97 = sphi 0, %s97
      %s99 = sphi 0, %s97
      %s100 = sphi 0, %s99
      %s114 = sphi 0, %s100
      %s118 = sphi 0, %s118
      %s120 = sphi 0, %s118
      %s121 = sphi 0, %s120
      %s135 = sphi 0, %s121
      %s139 = sphi 0, %s139
      %s141 = sphi 0, %s139
      %s142 = sphi 0, %s141
      %s156 = sphi 0, %s142
      %s160 = sphi 0, %s160
      %s162 = sphi 0, %s160
      %s163 = sphi 0, %s162
      %s177 = sphi 0, %s163
      %s183 = sphi 0, %s185
      %s186 = sphi 0, %s183
      %s187 = sphi 0, %s186
      %s203 = sphi 0, %s187
    $region4: #{tpu_custom_call.1} parent=1 // loop_header_branch
      %24 = sbr.rel (%p22) target = $region8
    $region5: #{tpu_custom_call.1} parent=1 // loop_body
      %s26 = ssub.s32 %s21, 1
      %s27 = ssub.s32 %s21, 2
      %s28 = sadd.s32 %s21, 1
      %s29 = ssub.s32 %s21, %s28
      %p30 = scmp.eq.s32.totalorder %s29, 0
      %s32 = sadd.s32 %s31, 1
      %s33 = scalar_select %p30, %s31, %s32
      %p36 = pneg %p30
      %p37 = scmp.eq.s32.totalorder %s21, 1
      %p38 = por %p36, %p37
      %p39 = scmp.ne.s32.totalorder %s31, %s34
      %p40 = scmp.eq.s32.totalorder %s21, 0
      %p41 = por %p39, %p40
      %p42 = scmp.ne.s32.totalorder %s31, %s34
      %p43 = scmp.eq.s32.totalorder %s26, 1
      %p44 = por %p42, %p43
      %p45 = scmp.ne.s32.totalorder %s34, %s35
      %p46 = scmp.eq.s32.totalorder %s26, 0
      %p47 = por %p45, %p46
      %p48 = scmp.ne.s32.totalorder %s34, %s35
      %p49 = scmp.eq.s32.totalorder %s27, 1
      %p50 = por %p48, %p49
      %p52 = scmp.ne.s32.totalorder %s35, %s51
      %p53 = scmp.eq.s32.totalorder %s27, 0
      %p54 = por %p52, %p53
      %s56 = sadd.s32 %s55, 1
      %p59 = scmp.eq.s32.totalorder %s21, 1
      %p60 = scmp.ne.s32.totalorder %s55, %s57
      %p61 = scmp.eq.s32.totalorder %s21, 0
      %p62 = por %p60, %p61
      %p63 = scmp.ne.s32.totalorder %s55, %s57
      %p64 = scmp.eq.s32.totalorder %s26, 1
      %p65 = por %p63, %p64
      %p66 = scmp.ne.s32.totalorder %s57, %s58
      %p67 = scmp.eq.s32.totalorder %s26, 0
      %p68 = por %p66, %p67
      %p69 = scmp.ne.s32.totalorder %s57, %s58
      %p70 = scmp.eq.s32.totalorder %s27, 1
      %p71 = por %p69, %p70
      %p73 = scmp.ne.s32.totalorder %s58, %s72
      %p74 = scmp.eq.s32.totalorder %s27, 0
      %p75 = por %p73, %p74
      %s77 = sadd.s32 %s76, 1
      %p80 = scmp.eq.s32.totalorder %s21, 1
      %p81 = scmp.ne.s32.totalorder %s76, %s78
      %p82 = scmp.eq.s32.totalorder %s21, 0
      %p83 = por %p81, %p82
      %p84 = scmp.ne.s32.totalorder %s76, %s78
      %p85 = scmp.eq.s32.totalorder %s26, 1
      %p86 = por %p84, %p85
      %p87 = scmp.ne.s32.totalorder %s78, %s79
      %p88 = scmp.eq.s32.totalorder %s26, 0
      %p89 = por %p87, %p88
      %p90 = scmp.ne.s32.totalorder %s78, %s79
      %p91 = scmp.eq.s32.totalorder %s27, 1
      %p92 = por %p90, %p91
      %p94 = scmp.ne.s32.totalorder %s79, %s93
      %p95 = scmp.eq.s32.totalorder %s27, 0
      %p96 = por %p94, %p95
      %s98 = sadd.s32 %s97, 1
      %p101 = scmp.eq.s32.totalorder %s21, 1
      %p102 = scmp.ne.s32.totalorder %s97, %s99
      %p103 = scmp.eq.s32.totalorder %s21, 0
      %p104 = por %p102, %p103
      %p105 = scmp.ne.s32.totalorder %s97, %s99
      %p106 = scmp.eq.s32.totalorder %s26, 1
      %p107 = por %p105, %p106
      %p108 = scmp.ne.s32.totalorder %s99, %s100
      %p109 = scmp.eq.s32.totalorder %s26, 0
      %p110 = por %p108, %p109
      %p111 = scmp.ne.s32.totalorder %s99, %s100
      %p112 = scmp.eq.s32.totalorder %s27, 1
      %p113 = por %p111, %p112
      %p115 = scmp.ne.s32.totalorder %s100, %s114
      %p116 = scmp.eq.s32.totalorder %s27, 0
      %p117 = por %p115, %p116
      %s119 = sadd.s32 %s118, 1
      %p122 = scmp.eq.s32.totalorder %s21, 1
      %p123 = scmp.ne.s32.totalorder %s118, %s120
      %p124 = scmp.eq.s32.totalorder %s21, 0
      %p125 = por %p123, %p124
      %p126 = scmp.ne.s32.totalorder %s118, %s120
      %p127 = scmp.eq.s32.totalorder %s26, 1
      %p128 = por %p126, %p127
      %p129 = scmp.ne.s32.totalorder %s120, %s121
      %p130 = scmp.eq.s32.totalorder %s26, 0
      %p131 = por %p129, %p130
      %p132 = scmp.ne.s32.totalorder %s120, %s121
      %p133 = scmp.eq.s32.totalorder %s27, 1
      %p134 = por %p132, %p133
      %p136 = scmp.ne.s32.totalorder %s121, %s135
      %p137 = scmp.eq.s32.totalorder %s27, 0
      %p138 = por %p136, %p137
      %s140 = sadd.s32 %s139, 1
      %p143 = scmp.eq.s32.totalorder %s21, 1
      %p144 = scmp.ne.s32.totalorder %s139, %s141
      %p145 = scmp.eq.s32.totalorder %s21, 0
      %p146 = por %p144, %p145
      %p147 = scmp.ne.s32.totalorder %s139, %s141
      %p148 = scmp.eq.s32.totalorder %s26, 1
      %p149 = por %p147, %p148
      %p150 = scmp.ne.s32.totalorder %s141, %s142
      %p151 = scmp.eq.s32.totalorder %s26, 0
      %p152 = por %p150, %p151
      %p153 = scmp.ne.s32.totalorder %s141, %s142
      %p154 = scmp.eq.s32.totalorder %s27, 1
      %p155 = por %p153, %p154
      %p157 = scmp.ne.s32.totalorder %s142, %s156
      %p158 = scmp.eq.s32.totalorder %s27, 0
      %p159 = por %p157, %p158
      %s161 = sadd.s32 %s160, 1
      %p164 = scmp.eq.s32.totalorder %s21, 1
      %p165 = scmp.ne.s32.totalorder %s160, %s162
      %p166 = scmp.eq.s32.totalorder %s21, 0
      %p167 = por %p165, %p166
      %p168 = scmp.ne.s32.totalorder %s160, %s162
      %p169 = scmp.eq.s32.totalorder %s26, 1
      %p170 = por %p168, %p169
      %p171 = scmp.ne.s32.totalorder %s162, %s163
      %p172 = scmp.eq.s32.totalorder %s26, 0
      %p173 = por %p171, %p172
      %p174 = scmp.ne.s32.totalorder %s162, %s163
      %p175 = scmp.eq.s32.totalorder %s27, 1
      %p176 = por %p174, %p175
      %p178 = scmp.ne.s32.totalorder %s163, %s177
      %p179 = scmp.eq.s32.totalorder %s27, 0
      %p180 = por %p178, %p179
      %s181 = ssub.s32 %s21, %s28
      %p182 = scmp.eq.s32.totalorder %s181, 0
      %s184 = sadd.s32 %s183, 1
      %s185 = scalar_select %p182, %s183, %s184
      %p188 = pneg %p182
      %p189 = scmp.eq.s32.totalorder %s21, 1
      %p190 = por %p188, %p189
      %p191 = scmp.ne.s32.totalorder %s183, %s186
      %p192 = scmp.eq.s32.totalorder %s21, 0
      %p193 = por %p191, %p192
      %p194 = scmp.ne.s32.totalorder %s183, %s186
      %p195 = scmp.eq.s32.totalorder %s26, 1
      %p196 = por %p194, %p195
      %p197 = scmp.ne.s32.totalorder %s186, %s187
      %p198 = scmp.eq.s32.totalorder %s26, 0
      %p199 = por %p197, %p198
      %p200 = scmp.ne.s32.totalorder %s186, %s187
      %p201 = scmp.eq.s32.totalorder %s27, 1
      %p202 = por %p200, %p201
      %p204 = scmp.ne.s32.totalorder %s187, %s203
      %p205 = scmp.eq.s32.totalorder %s27, 0
      %p206 = por %p204, %p205
      %p207 = scmp.le.s32.totalorder 1, %s21
      %p208 = scmp.lt.s32.totalorder %s21, 3
      %p209 = pnand %p207, %p208
      %p210 = pneg %p209
      // Predicated region
      $region9: #{tpu_custom_call.1} parent=5 // pred_check
        _
      $region10: #{tpu_custom_call.1} parent=5 // pred_check_branch
        %212 = sbr.rel (%p209) target = $region12
      $region11: #{tpu_custom_call.1} parent=5 // pred_region
        %s213 = ssub.s32 %s21, 1
        // Predicated region
        $region13: #{tpu_custom_call.1} parent=11 // pred_check
          %p214 = pneg %p68
        $region14: #{tpu_custom_call.1} parent=11 // pred_check_branch
          %216 = sbr.rel (%p214) target = $region16
        $region15: #{tpu_custom_call.1} parent=11 // pred_region
          %218 = vsyncadd [#allocation6], 0
          %s219 = sshll.u32 %s1, 4
          %s220 = int_to_ptr.hbm [resolvable:$true] %s219
          %s221 = sshll.u32 [#allocation5], 4
          %s222 = int_to_ptr.vmem [resolvable:$true] %s221
          %227 = dma.hbm_to_vmem [thread:$0]  %s220, 1024, %s222, [#allocation6], 64, 64, 4
        $region16: #{tpu_custom_call.1} parent=11 // pred_fallthru
          _
        // Predicated region
        $region17: #{tpu_custom_call.1} parent=11 // pred_check
          %p228 = pneg %p89
        $region18: #{tpu_custom_call.1} parent=11 // pred_check_branch
          %230 = sbr.rel (%p228) target = $region20
        $region19: #{tpu_custom_call.1} parent=11 // pred_region
          _
        $region20: #{tpu_custom_call.1} parent=11 // pred_fallthru
          _
        // Predicated region
        $region21: #{tpu_custom_call.1} parent=11 // pred_check
          %p231 = pneg %p110
        $region22: #{tpu_custom_call.1} parent=11 // pred_check_branch
          %233 = sbr.rel (%p231) target = $region24
        $region23: #{tpu_custom_call.1} parent=11 // pred_region
          %235 = vsyncadd [#allocation6], 0
          %s236 = sshll.u32 %s3, 4
          %s237 = int_to_ptr.hbm [resolvable:$true] %s236
          %s238 = sshll.u32 [#allocation7], 4
          %s239 = int_to_ptr.vmem [resolvable:$true] %s238
          %244 = dma.hbm_to_vmem [thread:$0]  %s237, 1024, %s239, [#allocation6], 64, 64, 4
        $region24: #{tpu_custom_call.1} parent=11 // pred_fallthru
          _
        // Predicated region
        $region25: #{tpu_custom_call.1} parent=11 // pred_check
          %p245 = pneg %p131
        $region26: #{tpu_custom_call.1} parent=11 // pred_check_branch
          %247 = sbr.rel (%p245) target = $region28
        $region27: #{tpu_custom_call.1} parent=11 // pred_region
          _
        $region28: #{tpu_custom_call.1} parent=11 // pred_fallthru
          _
        // Predicated region
        $region29: #{tpu_custom_call.1} parent=11 // pred_check
          %p248 = pneg %p152
        $region30: #{tpu_custom_call.1} parent=11 // pred_check_branch
          %250 = sbr.rel (%p248) target = $region32
        $region31: #{tpu_custom_call.1} parent=11 // pred_region
          %252 = vsyncadd [#allocation9], 0
          %s253 = sshll.u32 %s5, 4
          %s254 = int_to_ptr.hbm [resolvable:$true] %s253
          %s255 = sshll.u32 [#allocation8], 4
          %s256 = int_to_ptr.vmem [resolvable:$true] %s255
          %261 = dma.hbm_to_vmem [thread:$0]  %s254, 1024, %s256, [#allocation9], 64, 64, 4
        $region32: #{tpu_custom_call.1} parent=11 // pred_fallthru
          _
        // Predicated region
        $region33: #{tpu_custom_call.1} parent=11 // pred_check
          %p262 = pneg %p173
        $region34: #{tpu_custom_call.1} parent=11 // pred_check_branch
          %264 = sbr.rel (%p262) target = $region36
        $region35: #{tpu_custom_call.1} parent=11 // pred_region
          _
        $region36: #{tpu_custom_call.1} parent=11 // pred_fallthru
          _
      $region12: #{tpu_custom_call.1} parent=5 // pred_fallthru
        _
      %p265 = scmp.lt.s32.totalorder %s21, 2
      // Predicated region
      $region37: #{tpu_custom_call.1} parent=5 // pred_check
        %p266 = pneg %p265
      $region38: #{tpu_custom_call.1} parent=5 // pred_check_branch
        %268 = sbr.rel (%p266) target = $region40
      $region39: #{tpu_custom_call.1} parent=5 // pred_region
        // Predicated region
        $region41: #{tpu_custom_call.1} parent=39 // pred_check
          %p269 = pneg %p41
        $region42: #{tpu_custom_call.1} parent=39 // pred_check_branch
          %271 = sbr.rel (%p269) target = $region44
        $region43: #{tpu_custom_call.1} parent=39 // pred_region
          %s272 = sand.u32 %s31, 1
          %s273 = scalar_lea.sflag [#allocation3], %s272
          %s274 = sand.u32 %s31, 1
          %s275 = smul.addr %s274, 4
          %s276 = scalar_lea.vmem [#allocation2], %s275
          %278 = vsyncadd %s273, 0
          %s279 = smul.addr %s21, 4
          %s280 = scalar_lea.hbm %s0, %s279
          %s282 = sshll.u32 %s280, 4
          %s283 = int_to_ptr.hbm [resolvable:$true] %s282
          %s284 = sshll.u32 %s276, 4
          %s285 = int_to_ptr.vmem [resolvable:$true] %s284
          %287 = dma.hbm_to_vmem [thread:$0]  %s283, 64, %s285, %s273
        $region44: #{tpu_custom_call.1} parent=39 // pred_fallthru
          _
      $region40: #{tpu_custom_call.1} parent=5 // pred_fallthru
        _
      %p288 = scmp.le.s32.totalorder 1, %s21
      %p289 = scmp.lt.s32.totalorder %s21, 3
      %p290 = pnand %p288, %p289
      %p291 = pneg %p290
      // Predicated region
      $region45: #{tpu_custom_call.1} parent=5 // pred_check
        _
      $region46: #{tpu_custom_call.1} parent=5 // pred_check_branch
        %293 = sbr.rel (%p290) target = $region48
      $region47: #{tpu_custom_call.1} parent=5 // pred_region
        %s294 = ssub.s32 %s21, 1
        %s295 = sand.u32 %s34, 1
        %s296 = scalar_lea.sflag [#allocation3], %s295
        %s297 = sand.u32 %s34, 1
        %s298 = smul.addr %s297, 4
        %s299 = scalar_lea.vmem [#allocation2], %s298
        // Predicated region
        $region49: #{tpu_custom_call.1} parent=47 // pred_check
          %p300 = pneg %p47
        $region50: #{tpu_custom_call.1} parent=47 // pred_check_branch
          %302 = sbr.rel (%p300) target = $region52
        $region51: #{tpu_custom_call.1} parent=47 // pred_region
          %304 = dma.done %s296, 64
        $region52: #{tpu_custom_call.1} parent=47 // pred_fallthru
          _
        // Predicated region
        $region53: #{tpu_custom_call.1} parent=47 // pred_check
          %p305 = pneg %p68
        $region54: #{tpu_custom_call.1} parent=47 // pred_check_branch
          %307 = sbr.rel (%p305) target = $region56
        $region55: #{tpu_custom_call.1} parent=47 // pred_region
          %309 = dma.done [#allocation6], 1024
        $region56: #{tpu_custom_call.1} parent=47 // pred_fallthru
          _
        // Predicated region
        $region57: #{tpu_custom_call.1} parent=47 // pred_check
          %p310 = pneg %p110
        $region58: #{tpu_custom_call.1} parent=47 // pred_check_branch
          %312 = sbr.rel (%p310) target = $region60
        $region59: #{tpu_custom_call.1} parent=47 // pred_region
          %314 = dma.done [#allocation6], 1024
        $region60: #{tpu_custom_call.1} parent=47 // pred_fallthru
          _
        // Predicated region
        $region61: #{tpu_custom_call.1} parent=47 // pred_check
          %p315 = pneg %p152
        $region62: #{tpu_custom_call.1} parent=47 // pred_check_branch
          %317 = sbr.rel (%p315) target = $region64
        $region63: #{tpu_custom_call.1} parent=47 // pred_region
          %319 = dma.done [#allocation9], 1024
        $region64: #{tpu_custom_call.1} parent=47 // pred_fallthru
          _
        %s320 = sand.u32 %s34, 1
        %s321 = scalar_lea.sflag [#allocation3], %s320
        %s322 = sand.u32 %s34, 1
        %s323 = smul.addr %s322, 4
        %s324 = scalar_lea.vmem [#allocation2], %s323
        %p325 = pneg %p47
        %p326 = pneg %p44
        %p327 = pneg %p68
        %p328 = pneg %p65
        %p329 = pneg %p89
        %p330 = pneg %p86
        %p331 = pneg %p110
        %p332 = pneg %p107
        %p333 = pneg %p131
        %p334 = pneg %p128
        %p335 = pneg %p152
        %p336 = pneg %p149
        %p337 = pneg %p173
        %p338 = pneg %p170
        %p339 = pneg %p199
        %p340 = pneg %p196
        %s341 = sand.u32 %s186, 1
        %s342 = scalar_lea.sflag [#allocation4], %s341
        %s343 = sand.u32 %s186, 1
        %s344 = smul.addr %s343, 8
        %s345 = scalar_lea.vmem [#allocation10], %s344
        %v346 = vld [vmem:[%s299] sm:$0xf]
        %v347 = vld [vmem:[#allocation5] sm:$0xf]
        %v348 = vld [vmem:[#allocation5 + $0x4] sm:$0xf]
        %v349 = vld [vmem:[#allocation5 + $0x8] sm:$0xf]
        %v350 = vld [vmem:[#allocation5 + $0xc] sm:$0xf]
        %v351 = vld [vmem:[#allocation5 + $0x10] sm:$0xf]
        %v352 = vld [vmem:[#allocation5 + $0x14] sm:$0xf]
        %v353 = vld [vmem:[#allocation5 + $0x18] sm:$0xf]
        %v354 = vld [vmem:[#allocation5 + $0x1c] sm:$0xf]
        %v355 = vld [vmem:[#allocation5 + $0x20] sm:$0xf]
        %v356 = vld [vmem:[#allocation5 + $0x24] sm:$0xf]
        %v357 = vld [vmem:[#allocation5 + $0x28] sm:$0xf]
        %v358 = vld [vmem:[#allocation5 + $0x2c] sm:$0xf]
        %v359 = vld [vmem:[#allocation5 + $0x30] sm:$0xf]
        %v360 = vld [vmem:[#allocation5 + $0x34] sm:$0xf]
        %v361 = vld [vmem:[#allocation5 + $0x38] sm:$0xf]
        %v362 = vld [vmem:[#allocation5 + $0x3c] sm:$0xf]
        %v363 = vld [vmem:[%s2] sm:$0x1]
        %v365 = vperm.slane %v363, 0
        %v383 = vunpack.c.l.b16 %v347
        %v384 = vunpack.c.l.b16 %v348
        %v385 = vunpack.c.l.b16 %v349
        %v386 = vunpack.c.l.b16 %v350
        %v387 = vunpack.c.l.b16 %v351
        %v388 = vunpack.c.l.b16 %v352
        %v389 = vunpack.c.l.b16 %v353
        %v390 = vunpack.c.l.b16 %v354
        %v391 = vunpack.c.l.b16 %v355
        %v392 = vunpack.c.l.b16 %v356
        %v393 = vunpack.c.l.b16 %v357
        %v394 = vunpack.c.l.b16 %v358
        %v395 = vunpack.c.l.b16 %v359
        %v396 = vunpack.c.l.b16 %v360
        %v397 = vunpack.c.l.b16 %v361
        %v398 = vunpack.c.l.b16 %v362
        %v399 = vpack.c.b16 %v384, %v383
        %v400 = vpack.c.b16 %v386, %v385
        %v401 = vpack.c.b16 %v388, %v387
        %v402 = vpack.c.b16 %v390, %v389
        %v403 = vpack.c.b16 %v392, %v391
        %v404 = vpack.c.b16 %v394, %v393
        %v405 = vpack.c.b16 %v396, %v395
        %v406 = vpack.c.b16 %v398, %v397
        %415 = vmatpush.bf16.msra.mxu0 %v406
        %416 = vmatpush.bf16.msra.mxu0 %v405
        %417 = vmatpush.bf16.msra.mxu0 %v404
        %418 = vmatpush.bf16.msra.mxu0 %v403
        %419 = vmatpush.bf16.msra.mxu0 %v402
        %420 = vmatpush.bf16.msra.mxu0 %v401
        %421 = vmatpush.bf16.msra.mxu0 %v400
        %422 = vmatpush.bf16.msra.mxu0 %v399
        %423 = vmatmul.bf16.gmra.mxu0 %v346
        %v424 = vpop.f32.mrf.mxu0
        %v425 = vadd.f32 %v365, %v424
        %v426 = vpop.f32.mrf.mxu0
        %427 = vdwg.mxu0
        %v428 = vmax.f32 %v425, 0.0
        %v429 = vld [vmem:[#allocation7] sm:$0xf]
        %v430 = vld [vmem:[#allocation7 + $0x4] sm:$0xf]
        %v431 = vld [vmem:[#allocation7 + $0x8] sm:$0xf]
        %v432 = vld [vmem:[#allocation7 + $0xc] sm:$0xf]
        %v433 = vld [vmem:[#allocation7 + $0x10] sm:$0xf]
        %v434 = vld [vmem:[#allocation7 + $0x14] sm:$0xf]
        %v435 = vld [vmem:[#allocation7 + $0x18] sm:$0xf]
        %v436 = vld [vmem:[#allocation7 + $0x1c] sm:$0xf]
        %v437 = vld [vmem:[#allocation7 + $0x20] sm:$0xf]
        %v438 = vld [vmem:[#allocation7 + $0x24] sm:$0xf]
        %v439 = vld [vmem:[#allocation7 + $0x28] sm:$0xf]
        %v440 = vld [vmem:[#allocation7 + $0x2c] sm:$0xf]
        %v441 = vld [vmem:[#allocation7 + $0x30] sm:$0xf]
        %v442 = vld [vmem:[#allocation7 + $0x34] sm:$0xf]
        %v443 = vld [vmem:[#allocation7 + $0x38] sm:$0xf]
        %v444 = vld [vmem:[#allocation7 + $0x3c] sm:$0xf]
        %v445 = vld [vmem:[%s4] sm:$0x1]
        %v446 = vpack.c.bf16 %v428, %v428
        %v448 = vperm.slane %v445, 0
        %v466 = vunpack.c.l.b16 %v429
        %v467 = vunpack.c.l.b16 %v430
        %v468 = vunpack.c.l.b16 %v431
        %v469 = vunpack.c.l.b16 %v432
        %v470 = vunpack.c.l.b16 %v433
        %v471 = vunpack.c.l.b16 %v434
        %v472 = vunpack.c.l.b16 %v435
        %v473 = vunpack.c.l.b16 %v436
        %v474 = vunpack.c.l.b16 %v437
        %v475 = vunpack.c.l.b16 %v438
        %v476 = vunpack.c.l.b16 %v439
        %v477 = vunpack.c.l.b16 %v440
        %v478 = vunpack.c.l.b16 %v441
        %v479 = vunpack.c.l.b16 %v442
        %v480 = vunpack.c.l.b16 %v443
        %v481 = vunpack.c.l.b16 %v444
        %v482 = vpack.c.b16 %v467, %v466
        %v483 = vpack.c.b16 %v469, %v468
        %v484 = vpack.c.b16 %v471, %v470
        %v485 = vpack.c.b16 %v473, %v472
        %v486 = vpack.c.b16 %v475, %v474
        %v487 = vpack.c.b16 %v477, %v476
        %v488 = vpack.c.b16 %v479, %v478
        %v489 = vpack.c.b16 %v481, %v480
        %498 = vmatpush.bf16.msra.mxu0 %v489
        %499 = vmatpush.bf16.msra.mxu0 %v488
        %500 = vmatpush.bf16.msra.mxu0 %v487
        %501 = vmatpush.bf16.msra.mxu0 %v486
        %502 = vmatpush.bf16.msra.mxu0 %v485
        %503 = vmatpush.bf16.msra.mxu0 %v484
        %504 = vmatpush.bf16.msra.mxu0 %v483
        %505 = vmatpush.bf16.msra.mxu0 %v482
        %506 = vmatmul.bf16.gmra.mxu0 %v446
        %v507 = vpop.f32.mrf.mxu0
        %v508 = vadd.f32 %v448, %v507
        %v509 = vpop.f32.mrf.mxu0
        %510 = vdwg.mxu0
        %v511 = vmax.f32 %v508, 0.0
        %v512 = vld [vmem:[#allocation8] sm:$0xf]
        %v513 = vld [vmem:[#allocation8 + $0x4] sm:$0xf]
        %v514 = vld [vmem:[#allocation8 + $0x8] sm:$0xf]
        %v515 = vld [vmem:[#allocation8 + $0xc] sm:$0xf]
        %v516 = vld [vmem:[#allocation8 + $0x10] sm:$0xf]
        %v517 = vld [vmem:[#allocation8 + $0x14] sm:$0xf]
        %v518 = vld [vmem:[#allocation8 + $0x18] sm:$0xf]
        %v519 = vld [vmem:[#allocation8 + $0x1c] sm:$0xf]
        %v520 = vld [vmem:[#allocation8 + $0x20] sm:$0xf]
        %v521 = vld [vmem:[#allocation8 + $0x24] sm:$0xf]
        %v522 = vld [vmem:[#allocation8 + $0x28] sm:$0xf]
        %v523 = vld [vmem:[#allocation8 + $0x2c] sm:$0xf]
        %v524 = vld [vmem:[#allocation8 + $0x30] sm:$0xf]
        %v525 = vld [vmem:[#allocation8 + $0x34] sm:$0xf]
        %v526 = vld [vmem:[#allocation8 + $0x38] sm:$0xf]
        %v527 = vld [vmem:[#allocation8 + $0x3c] sm:$0xf]
        %v528 = vld [vmem:[%s6] sm:$0x1]
        %v529 = vpack.c.bf16 %v511, %v511
        %v531 = vperm.slane %v528, 0
        %v549 = vunpack.c.l.b16 %v512
        %v550 = vunpack.c.l.b16 %v513
        %v551 = vunpack.c.l.b16 %v514
        %v552 = vunpack.c.l.b16 %v515
        %v553 = vunpack.c.l.b16 %v516
        %v554 = vunpack.c.l.b16 %v517
        %v555 = vunpack.c.l.b16 %v518
        %v556 = vunpack.c.l.b16 %v519
        %v557 = vunpack.c.l.b16 %v520
        %v558 = vunpack.c.l.b16 %v521
        %v559 = vunpack.c.l.b16 %v522
        %v560 = vunpack.c.l.b16 %v523
        %v561 = vunpack.c.l.b16 %v524
        %v562 = vunpack.c.l.b16 %v525
        %v563 = vunpack.c.l.b16 %v526
        %v564 = vunpack.c.l.b16 %v527
        %v565 = vpack.c.b16 %v550, %v549
        %v566 = vpack.c.b16 %v552, %v551
        %v567 = vpack.c.b16 %v554, %v553
        %v568 = vpack.c.b16 %v556, %v555
        %v569 = vpack.c.b16 %v558, %v557
        %v570 = vpack.c.b16 %v560, %v559
        %v571 = vpack.c.b16 %v562, %v561
        %v572 = vpack.c.b16 %v564, %v563
        %581 = vmatpush.bf16.msra.mxu0 %v572
        %582 = vmatpush.bf16.msra.mxu0 %v571
        %583 = vmatpush.bf16.msra.mxu0 %v570
        %584 = vmatpush.bf16.msra.mxu0 %v569
        %585 = vmatpush.bf16.msra.mxu0 %v568
        %586 = vmatpush.bf16.msra.mxu0 %v567
        %587 = vmatpush.bf16.msra.mxu0 %v566
        %588 = vmatpush.bf16.msra.mxu0 %v565
        %589 = vmatmul.bf16.gmra.mxu0 %v529
        %v590 = vpop.f32.mrf.mxu0
        %v591 = vadd.f32 %v531, %v590
        %v592 = vpop.f32.mrf.mxu0
        %593 = vdwg.mxu0
        %594 = vmax.xlane.f32.xlu0 %v591
        %v595 = vpop.xlane.xlu0 %594
        %v596 = vsub.f32 %v591, %v595
        %v597 = vmul.f32 %v596, 1.442695
        %v598 = vpow.pop %v597
        %599 = vadd.xlane.f32.xlu0 %v598
        %v600 = vpop.xlane.xlu0 %599
        %v601 = vlog2.pop %v600
        %v602 = vmul.f32 %v601, 0.6931472
        %v603 = vsub.f32 %v596, %v602
        %604 = vst [vmem:[%s345] sm:$0xff] %v603
        %s605 = sand.u32 %s186, 1
        %s606 = scalar_lea.sflag [#allocation4], %s605
        %s607 = sand.u32 %s186, 1
        %s608 = smul.addr %s607, 8
        %s609 = scalar_lea.vmem [#allocation10], %s608
        // Predicated region
        $region65: #{tpu_custom_call.1} parent=47 // pred_check
          %p610 = pneg %p196
        $region66: #{tpu_custom_call.1} parent=47 // pred_check_branch
          %612 = sbr.rel (%p610) target = $region68
        $region67: #{tpu_custom_call.1} parent=47 // pred_region
          %614 = vsyncadd %s606, 0
          %s615 = smul.addr %s26, 8
          %s616 = scalar_lea.hbm %s7, %s615
          %s618 = sshll.u32 %s609, 4
          %s619 = int_to_ptr.vmem [resolvable:$true] %s618
          %s620 = sshll.u32 %s616, 4
          %s621 = int_to_ptr.hbm [resolvable:$true] %s620
          %623 = dma.vmem_to_hbm [thread:$0]  %s619, 128, %s621, %s606
        $region68: #{tpu_custom_call.1} parent=47 // pred_fallthru
          _
      $region48: #{tpu_custom_call.1} parent=5 // pred_fallthru
        _
      %p624 = scmp.le.s32.totalorder 2, %s21
      // Predicated region
      $region69: #{tpu_custom_call.1} parent=5 // pred_check
        %p625 = pneg %p624
      $region70: #{tpu_custom_call.1} parent=5 // pred_check_branch
        %627 = sbr.rel (%p625) target = $region72
      $region71: #{tpu_custom_call.1} parent=5 // pred_region
        %s628 = ssub.s32 %s21, 2
        // Predicated region
        $region73: #{tpu_custom_call.1} parent=71 // pred_check
          %p629 = pneg %p202
        $region74: #{tpu_custom_call.1} parent=71 // pred_check_branch
          %631 = sbr.rel (%p629) target = $region76
        $region75: #{tpu_custom_call.1} parent=71 // pred_region
          %s632 = sand.u32 %s187, 1
          %s633 = scalar_lea.sflag [#allocation4], %s632
          %s634 = sand.u32 %s187, 1
          %s635 = smul.addr %s634, 8
          %s636 = scalar_lea.vmem [#allocation10], %s635
          %638 = dma.done %s633, 128
        $region76: #{tpu_custom_call.1} parent=71 // pred_fallthru
          _
      $region72: #{tpu_custom_call.1} parent=5 // pred_fallthru
        _
    $region6: #{tpu_custom_call.1} parent=1 // loop_footer
      %s25 = sadd.s32 1, %s21
    $region7: #{tpu_custom_call.1} parent=1 // loop_footer_branch
      %20 = sbr.rel target = $region3
    $region8: #{tpu_custom_call.1} parent=1 // loop_exit
      _
    %639 = vsyncpa [#allocation3], 1
    %s640 = scalar_lea.sflag [#allocation3], 1
    %641 = vsyncpa %s640, 1
    %642 = vsyncpa [#allocation6], 1
    %643 = vsyncpa [#allocation9], 1
    %644 = vsyncpa [#allocation4], 1
    %s645 = scalar_lea.sflag [#allocation4], 1
    %646 = vsyncpa %s645, 1

// kernel: tpu_custom_call.1
$region0: #{tpu_custom_call.1}
  #allocation0 [shape = 'u32[]', space=smem, size = 0x4, offset = 0x4, fixed_abs, tag = 'smem constant byte address 0x4 - core index']
  #allocation1 [shape = 'u32[72,128]{1,0:T(1,128)}', space=vmem, size = 0x9000, scoped, tag = 'internal scratch']
  %s0 = inlined_call_operand.hbm [shape: bf16[16,128], index: 0, kind: input, shape index: {}]
  %s1 = inlined_call_operand.hbm [shape: bf16[128,128], index: 1, kind: input, shape index: {}]
  %s2 = inlined_call_operand.vmem [shape: f32[1,128], index: 2, kind: input, shape index: {}]
  %s3 = inlined_call_operand.hbm [shape: bf16[128,128], index: 3, kind: input, shape index: {}]
  %s4 = inlined_call_operand.vmem [shape: f32[1,128], index: 4, kind: input, shape index: {}]
  %s5 = inlined_call_operand.hbm [shape: bf16[128,128], index: 5, kind: input, shape index: {}]
  %s6 = inlined_call_operand.vmem [shape: f32[1,128], index: 6, kind: input, shape index: {}]
  %s7 = inlined_call_operand.hbm [shape: f32[16,128], index: 7, kind: output, shape index: {}]
  %s8 = sld [smem:[#allocation0]]
  $region77: #{tpu_custom_call.1} parent=0
    _
  %s10 = ssub.s32 1, %s8
  %s11 = scalar_select 0, %s10, %s8
  $region1: #{tpu_custom_call.1} parent=0
    #allocation2 [shape = 'u8[4096]{0}', space=vmem, size = 0x1000, scoped, tag = 'input window, operand 0']
    #allocation3 [shape = 's32[2]{0}', space=sflag, size = 0x8, scoped, tag = 'scoped memory for tpu_custom_call.1']
    #allocation4 [shape = 's32[2]{0}', space=sflag, size = 0x8, scoped, tag = 'scoped memory for tpu_custom_call.1']
    #allocation5 [shape = 'u8[32768]{0}', space=vmem, size = 0x8000, scoped, tag = 'input window, operand 1, single buffered']
    #allocation6 [shape = 's32[1]{0}', space=sflag, size = 0x4, scoped, tag = 'scoped memory for tpu_custom_call.1']
    #allocation7 [shape = 'u8[32768]{0}', space=vmem, size = 0x8000, scoped, tag = 'input window, operand 3, single buffered']
    #allocation8 [shape = 'u8[32768]{0}', space=vmem, size = 0x8000, scoped, tag = 'input window, operand 5, single buffered']
    #allocation9 [shape = 's32[1]{0}', space=sflag, size = 0x4, scoped, tag = 'scoped memory for tpu_custom_call.1']
    #allocation10 [shape = 'u8[8192]{0}', space=vmem, size = 0x2000, scoped, tag = 'output window, operand 0']
    %12 = vsyncpa [#allocation3], 0
    %s13 = scalar_lea.sflag [#allocation3], 1
    %14 = vsyncpa %s13, 0
    %15 = vsyncpa [#allocation6], 0
    %16 = vsyncpa [#allocation9], 0
    %17 = vsyncpa [#allocation4], 0
    %s18 = scalar_lea.sflag [#allocation4], 1
    %19 = vsyncpa %s18, 0
    loop: start=0, step=1, limit=4
    $region2: #{tpu_custom_call.1} parent=1 // loop_pre_header
      _
    $region3: #{tpu_custom_call.1} parent=1 // loop_header
      %s21 = sphi 0, %s25
      %p22 = scmp.ge.s32.totalorder %s21, 4
      %s31 = sphi 0, %s33
      %s34 = sphi 0, %s31
      %s35 = sphi 0, %s34
      %s51 = sphi 0, %s35
      %s55 = sphi 0, %s55
      %s57 = sphi 0, %s55
      %s58 = sphi 0, %s57
      %s72 = sphi 0, %s58
      %s76 = sphi 0, %s76
      %s78 = sphi 0, %s76
      %s79 = sphi 0, %s78
      %s93 = sphi 0, %s79
      %s97 = sphi 0, %s97
      %s99 = sphi 0, %s97
      %s100 = sphi 0, %s99
      %s114 = sphi 0, %s100
      %s118 = sphi 0, %s118
      %s120 = sphi 0, %s118
      %s121 = sphi 0, %s120
      %s135 = sphi 0, %s121
      %s139 = sphi 0, %s139
      %s141 = sphi 0, %s139
      %s142 = sphi 0, %s141
      %s156 = sphi 0, %s142
      %s160 = sphi 0, %s160
      %s162 = sphi 0, %s160
      %s163 = sphi 0, %s162
      %s177 = sphi 0, %s163
      %s183 = sphi 0, %s185
      %s186 = sphi 0, %s183
      %s187 = sphi 0, %s186
      %s203 = sphi 0, %s187
    $region4: #{tpu_custom_call.1} parent=1 // loop_header_branch
      %24 = sbr.rel (%p22) target = $region8
    $region5: #{tpu_custom_call.1} parent=1 // loop_body
      %s26 = ssub.s32 %s21, 1
      %s27 = ssub.s32 %s21, 2
      %s28 = sadd.s32 %s21, 1
      %s29 = ssub.s32 %s21, %s28
      %p30 = scmp.eq.s32.totalorder %s29, 0
      %s32 = sadd.s32 %s31, 1
      %s33 = scalar_select %p30, %s31, %s32
      %p36 = pneg %p30
      %p37 = scmp.eq.s32.totalorder %s21, 1
      %p38 = por %p36, %p37
      %p39 = scmp.ne.s32.totalorder %s31, %s34
      %p40 = scmp.eq.s32.totalorder %s21, 0
      %p41 = por %p39, %p40
      %p42 = scmp.ne.s32.totalorder %s31, %s34
      %p43 = scmp.eq.s32.totalorder %s26, 1
      %p44 = por %p42, %p43
      %p45 = scmp.ne.s32.totalorder %s34, %s35
      %p46 = scmp.eq.s32.totalorder %s26, 0
      %p47 = por %p45, %p46
      %p48 = scmp.ne.s32.totalorder %s34, %s35
      %p49 = scmp.eq.s32.totalorder %s27, 1
      %p50 = por %p48, %p49
      %p52 = scmp.ne.s32.totalorder %s35, %s51
      %p53 = scmp.eq.s32.totalorder %s27, 0
      %p54 = por %p52, %p53
      %s56 = sadd.s32 %s55, 1
      %p59 = scmp.eq.s32.totalorder %s21, 1
      %p60 = scmp.ne.s32.totalorder %s55, %s57
      %p61 = scmp.eq.s32.totalorder %s21, 0
      %p62 = por %p60, %p61
      %p63 = scmp.ne.s32.totalorder %s55, %s57
      %p64 = scmp.eq.s32.totalorder %s26, 1
      %p65 = por %p63, %p64
      %p66 = scmp.ne.s32.totalorder %s57, %s58
      %p67 = scmp.eq.s32.totalorder %s26, 0
      %p68 = por %p66, %p67
      %p69 = scmp.ne.s32.totalorder %s57, %s58
      %p70 = scmp.eq.s32.totalorder %s27, 1
      %p71 = por %p69, %p70
      %p73 = scmp.ne.s32.totalorder %s58, %s72
      %p74 = scmp.eq.s32.totalorder %s27, 0
      %p75 = por %p73, %p74
      %s77 = sadd.s32 %s76, 1
      %p80 = scmp.eq.s32.totalorder %s21, 1
      %p81 = scmp.ne.s32.totalorder %s76, %s78
      %p82 = scmp.eq.s32.totalorder %s21, 0
      %p83 = por %p81, %p82
      %p84 = scmp.ne.s32.totalorder %s76, %s78
      %p85 = scmp.eq.s32.totalorder %s26, 1
      %p86 = por %p84, %p85
      %p87 = scmp.ne.s32.totalorder %s78, %s79
      %p88 = scmp.eq.s32.totalorder %s26, 0
      %p89 = por %p87, %p88
      %p90 = scmp.ne.s32.totalorder %s78, %s79
      %p91 = scmp.eq.s32.totalorder %s27, 1
      %p92 = por %p90, %p91
      %p94 = scmp.ne.s32.totalorder %s79, %s93
      %p95 = scmp.eq.s32.totalorder %s27, 0
      %p96 = por %p94, %p95
      %s98 = sadd.s32 %s97, 1
      %p101 = scmp.eq.s32.totalorder %s21, 1
      %p102 = scmp.ne.s32.totalorder %s97, %s99
      %p103 = scmp.eq.s32.totalorder %s21, 0
      %p104 = por %p102, %p103
      %p105 = scmp.ne.s32.totalorder %s97, %s99
      %p106 = scmp.eq.s32.totalorder %s26, 1
      %p107 = por %p105, %p106
      %p108 = scmp.ne.s32.totalorder %s99, %s100
      %p109 = scmp.eq.s32.totalorder %s26, 0
      %p110 = por %p108, %p109
      %p111 = scmp.ne.s32.totalorder %s99, %s100
      %p112 = scmp.eq.s32.totalorder %s27, 1
      %p113 = por %p111, %p112
      %p115 = scmp.ne.s32.totalorder %s100, %s114
      %p116 = scmp.eq.s32.totalorder %s27, 0
      %p117 = por %p115, %p116
      %s119 = sadd.s32 %s118, 1
      %p122 = scmp.eq.s32.totalorder %s21, 1
      %p123 = scmp.ne.s32.totalorder %s118, %s120
      %p124 = scmp.eq.s32.totalorder %s21, 0
      %p125 = por %p123, %p124
      %p126 = scmp.ne.s32.totalorder %s118, %s120
      %p127 = scmp.eq.s32.totalorder %s26, 1
      %p128 = por %p126, %p127
      %p129 = scmp.ne.s32.totalorder %s120, %s121
      %p130 = scmp.eq.s32.totalorder %s26, 0
      %p131 = por %p129, %p130
      %p132 = scmp.ne.s32.totalorder %s120, %s121
      %p133 = scmp.eq.s32.totalorder %s27, 1
      %p134 = por %p132, %p133
      %p136 = scmp.ne.s32.totalorder %s121, %s135
      %p137 = scmp.eq.s32.totalorder %s27, 0
      %p138 = por %p136, %p137
      %s140 = sadd.s32 %s139, 1
      %p143 = scmp.eq.s32.totalorder %s21, 1
      %p144 = scmp.ne.s32.totalorder %s139, %s141
      %p145 = scmp.eq.s32.totalorder %s21, 0
      %p146 = por %p144, %p145
      %p147 = scmp.ne.s32.totalorder %s139, %s141
      %p148 = scmp.eq.s32.totalorder %s26, 1
      %p149 = por %p147, %p148
      %p150 = scmp.ne.s32.totalorder %s141, %s142
      %p151 = scmp.eq.s32.totalorder %s26, 0
      %p152 = por %p150, %p151
      %p153 = scmp.ne.s32.totalorder %s141, %s142
      %p154 = scmp.eq.s32.totalorder %s27, 1
      %p155 = por %p153, %p154
      %p157 = scmp.ne.s32.totalorder %s142, %s156
      %p158 = scmp.eq.s32.totalorder %s27, 0
      %p159 = por %p157, %p158
      %s161 = sadd.s32 %s160, 1
      %p164 = scmp.eq.s32.totalorder %s21, 1
      %p165 = scmp.ne.s32.totalorder %s160, %s162
      %p166 = scmp.eq.s32.totalorder %s21, 0
      %p167 = por %p165, %p166
      %p168 = scmp.ne.s32.totalorder %s160, %s162
      %p169 = scmp.eq.s32.totalorder %s26, 1
      %p170 = por %p168, %p169
      %p171 = scmp.ne.s32.totalorder %s162, %s163
      %p172 = scmp.eq.s32.totalorder %s26, 0
      %p173 = por %p171, %p172
      %p174 = scmp.ne.s32.totalorder %s162, %s163
      %p175 = scmp.eq.s32.totalorder %s27, 1
      %p176 = por %p174, %p175
      %p178 = scmp.ne.s32.totalorder %s163, %s177
      %p179 = scmp.eq.s32.totalorder %s27, 0
      %p180 = por %p178, %p179
      %s181 = ssub.s32 %s21, %s28
      %p182 = scmp.eq.s32.totalorder %s181, 0
      %s184 = sadd.s32 %s183, 1
      %s185 = scalar_select %p182, %s183, %s184
      %p188 = pneg %p182
      %p189 = scmp.eq.s32.totalorder %s21, 1
      %p190 = por %p188, %p189
      %p191 = scmp.ne.s32.totalorder %s183, %s186
      %p192 = scmp.eq.s32.totalorder %s21, 0
      %p193 = por %p191, %p192
      %p194 = scmp.ne.s32.totalorder %s183, %s186
      %p195 = scmp.eq.s32.totalorder %s26, 1
      %p196 = por %p194, %p195
      %p197 = scmp.ne.s32.totalorder %s186, %s187
      %p198 = scmp.eq.s32.totalorder %s26, 0
      %p199 = por %p197, %p198
      %p200 = scmp.ne.s32.totalorder %s186, %s187
      %p201 = scmp.eq.s32.totalorder %s27, 1
      %p202 = por %p200, %p201
      %p204 = scmp.ne.s32.totalorder %s187, %s203
      %p205 = scmp.eq.s32.totalorder %s27, 0
      %p206 = por %p204, %p205
      %p207 = scmp.le.s32.totalorder 1, %s21
      %p208 = scmp.lt.s32.totalorder %s21, 3
      %p209 = pnand %p207, %p208
      %p210 = pneg %p209
      // Predicated region
      $region9: #{tpu_custom_call.1} parent=5 // pred_check
        _
      $region10: #{tpu_custom_call.1} parent=5 // pred_check_branch
        %212 = sbr.rel (%p209) target = $region12
      $region11: #{tpu_custom_call.1} parent=5 // pred_region
        %s213 = ssub.s32 %s21, 1
        // Predicated region
        $region13: #{tpu_custom_call.1} parent=11 // pred_check
          %p214 = pneg %p68
        $region14: #{tpu_custom_call.1} parent=11 // pred_check_branch
          %216 = sbr.rel (%p214) target = $region16
        $region15: #{tpu_custom_call.1} parent=11 // pred_region
          %218 = vsyncadd [#allocation6], 0
          %s219 = sshll.u32 %s1, 4
          %s220 = int_to_ptr.hbm [resolvable:$true] %s219
          %s221 = sshll.u32 [#allocation5], 4
          %s222 = int_to_ptr.vmem [resolvable:$true] %s221
          %227 = dma.hbm_to_vmem [thread:$0]  %s220, 1024, %s222, [#allocation6], 64, 64, 4
        $region16: #{tpu_custom_call.1} parent=11 // pred_fallthru
          _
        // Predicated region
        $region17: #{tpu_custom_call.1} parent=11 // pred_check
          %p228 = pneg %p89
        $region18: #{tpu_custom_call.1} parent=11 // pred_check_branch
          %230 = sbr.rel (%p228) target = $region20
        $region19: #{tpu_custom_call.1} parent=11 // pred_region
          _
        $region20: #{tpu_custom_call.1} parent=11 // pred_fallthru
          _
        // Predicated region
        $region21: #{tpu_custom_call.1} parent=11 // pred_check
          %p231 = pneg %p110
        $region22: #{tpu_custom_call.1} parent=11 // pred_check_branch
          %233 = sbr.rel (%p231) target = $region24
        $region23: #{tpu_custom_call.1} parent=11 // pred_region
          %235 = vsyncadd [#allocation6], 0
          %s236 = sshll.u32 %s3, 4
          %s237 = int_to_ptr.hbm [resolvable:$true] %s236
          %s238 = sshll.u32 [#allocation7], 4
          %s239 = int_to_ptr.vmem [resolvable:$true] %s238
          %244 = dma.hbm_to_vmem [thread:$0]  %s237, 1024, %s239, [#allocation6], 64, 64, 4
        $region24: #{tpu_custom_call.1} parent=11 // pred_fallthru
          _
        // Predicated region
        $region25: #{tpu_custom_call.1} parent=11 // pred_check
          %p245 = pneg %p131
        $region26: #{tpu_custom_call.1} parent=11 // pred_check_branch
          %247 = sbr.rel (%p245) target = $region28
        $region27: #{tpu_custom_call.1} parent=11 // pred_region
          _
        $region28: #{tpu_custom_call.1} parent=11 // pred_fallthru
          _
        // Predicated region
        $region29: #{tpu_custom_call.1} parent=11 // pred_check
          %p248 = pneg %p152
        $region30: #{tpu_custom_call.1} parent=11 // pred_check_branch
          %250 = sbr.rel (%p248) target = $region32
        $region31: #{tpu_custom_call.1} parent=11 // pred_region
          %252 = vsyncadd [#allocation9], 0
          %s253 = sshll.u32 %s5, 4
          %s254 = int_to_ptr.hbm [resolvable:$true] %s253
          %s255 = sshll.u32 [#allocation8], 4
          %s256 = int_to_ptr.vmem [resolvable:$true] %s255
          %261 = dma.hbm_to_vmem [thread:$0]  %s254, 1024, %s256, [#allocation9], 64, 64, 4
        $region32: #{tpu_custom_call.1} parent=11 // pred_fallthru
          _
        // Predicated region
        $region33: #{tpu_custom_call.1} parent=11 // pred_check
          %p262 = pneg %p173
        $region34: #{tpu_custom_call.1} parent=11 // pred_check_branch
          %264 = sbr.rel (%p262) target = $region36
        $region35: #{tpu_custom_call.1} parent=11 // pred_region
          _
        $region36: #{tpu_custom_call.1} parent=11 // pred_fallthru
          _
      $region12: #{tpu_custom_call.1} parent=5 // pred_fallthru
        _
      %p265 = scmp.lt.s32.totalorder %s21, 2
      // Predicated region
      $region37: #{tpu_custom_call.1} parent=5 // pred_check
        %p266 = pneg %p265
      $region38: #{tpu_custom_call.1} parent=5 // pred_check_branch
        %268 = sbr.rel (%p266) target = $region40
      $region39: #{tpu_custom_call.1} parent=5 // pred_region
        // Predicated region
        $region41: #{tpu_custom_call.1} parent=39 // pred_check
          %p269 = pneg %p41
        $region42: #{tpu_custom_call.1} parent=39 // pred_check_branch
          %271 = sbr.rel (%p269) target = $region44
        $region43: #{tpu_custom_call.1} parent=39 // pred_region
          %s272 = sand.u32 %s31, 1
          %s273 = scalar_lea.sflag [#allocation3], %s272
          %s274 = sand.u32 %s31, 1
          %s275 = smul.addr %s274, 4
          %s276 = scalar_lea.vmem [#allocation2], %s275
          %278 = vsyncadd %s273, 0
          %s279 = smul.addr %s21, 4
          %s280 = scalar_lea.hbm %s0, %s279
          %s282 = sshll.u32 %s280, 4
          %s283 = int_to_ptr.hbm [resolvable:$true] %s282
          %s284 = sshll.u32 %s276, 4
          %s285 = int_to_ptr.vmem [resolvable:$true] %s284
          %287 = dma.hbm_to_vmem [thread:$0]  %s283, 64, %s285, %s273
        $region44: #{tpu_custom_call.1} parent=39 // pred_fallthru
          _
      $region40: #{tpu_custom_call.1} parent=5 // pred_fallthru
        _
      %p288 = scmp.le.s32.totalorder 1, %s21
      %p289 = scmp.lt.s32.totalorder %s21, 3
      %p290 = pnand %p288, %p289
      %p291 = pneg %p290
      // Predicated region
      $region45: #{tpu_custom_call.1} parent=5 // pred_check
        _
      $region46: #{tpu_custom_call.1} parent=5 // pred_check_branch
        %293 = sbr.rel (%p290) target = $region48
      $region47: #{tpu_custom_call.1} parent=5 // pred_region
        %s294 = ssub.s32 %s21, 1
        %s295 = sand.u32 %s34, 1
        %s296 = scalar_lea.sflag [#allocation3], %s295
        %s297 = sand.u32 %s34, 1
        %s298 = smul.addr %s297, 4
        %s299 = scalar_lea.vmem [#allocation2], %s298
        // Predicated region
        $region49: #{tpu_custom_call.1} parent=47 // pred_check
          %p300 = pneg %p47
        $region50: #{tpu_custom_call.1} parent=47 // pred_check_branch
          %302 = sbr.rel (%p300) target = $region52
        $region51: #{tpu_custom_call.1} parent=47 // pred_region
          %304 = dma.done %s296, 64
        $region52: #{tpu_custom_call.1} parent=47 // pred_fallthru
          _
        // Predicated region
        $region53: #{tpu_custom_call.1} parent=47 // pred_check
          %p305 = pneg %p68
        $region54: #{tpu_custom_call.1} parent=47 // pred_check_branch
          %307 = sbr.rel (%p305) target = $region56
        $region55: #{tpu_custom_call.1} parent=47 // pred_region
          %309 = dma.done [#allocation6], 1024
        $region56: #{tpu_custom_call.1} parent=47 // pred_fallthru
          _
        // Predicated region
        $region57: #{tpu_custom_call.1} parent=47 // pred_check
          %p310 = pneg %p110
        $region58: #{tpu_custom_call.1} parent=47 // pred_check_branch
          %312 = sbr.rel (%p310) target = $region60
        $region59: #{tpu_custom_call.1} parent=47 // pred_region
          %314 = dma.done [#allocation6], 1024
        $region60: #{tpu_custom_call.1} parent=47 // pred_fallthru
          _
        // Predicated region
        $region61: #{tpu_custom_call.1} parent=47 // pred_check
          %p315 = pneg %p152
        $region62: #{tpu_custom_call.1} parent=47 // pred_check_branch
          %317 = sbr.rel (%p315) target = $region64
        $region63: #{tpu_custom_call.1} parent=47 // pred_region
          %319 = dma.done [#allocation9], 1024
        $region64: #{tpu_custom_call.1} parent=47 // pred_fallthru
          _
        %s320 = sand.u32 %s34, 1
        %s321 = scalar_lea.sflag [#allocation3], %s320
        %s322 = sand.u32 %s34, 1
        %s323 = smul.addr %s322, 4
        %s324 = scalar_lea.vmem [#allocation2], %s323
        %p325 = pneg %p47
        %p326 = pneg %p44
        %p327 = pneg %p68
        %p328 = pneg %p65
        %p329 = pneg %p89
        %p330 = pneg %p86
        %p331 = pneg %p110
        %p332 = pneg %p107
        %p333 = pneg %p131
        %p334 = pneg %p128
        %p335 = pneg %p152
        %p336 = pneg %p149
        %p337 = pneg %p173
        %p338 = pneg %p170
        %p339 = pneg %p199
        %p340 = pneg %p196
        %s341 = sand.u32 %s186, 1
        %s342 = scalar_lea.sflag [#allocation4], %s341
        %s343 = sand.u32 %s186, 1
        %s344 = smul.addr %s343, 8
        %s345 = scalar_lea.vmem [#allocation10], %s344
        %v346 = vld [vmem:[%s299] sm:$0xf]
        %v347 = vld [vmem:[#allocation5] sm:$0xf]
        %v348 = vld [vmem:[#allocation5 + $0x4] sm:$0xf]
        %v349 = vld [vmem:[#allocation5 + $0x8] sm:$0xf]
        %v350 = vld [vmem:[#allocation5 + $0xc] sm:$0xf]
        %v351 = vld [vmem:[#allocation5 + $0x10] sm:$0xf]
        %v352 = vld [vmem:[#allocation5 + $0x14] sm:$0xf]
        %v353 = vld [vmem:[#allocation5 + $0x18] sm:$0xf]
        %v354 = vld [vmem:[#allocation5 + $0x1c] sm:$0xf]
        %v355 = vld [vmem:[#allocation5 + $0x20] sm:$0xf]
        %v356 = vld [vmem:[#allocation5 + $0x24] sm:$0xf]
        %v357 = vld [vmem:[#allocation5 + $0x28] sm:$0xf]
        %v358 = vld [vmem:[#allocation5 + $0x2c] sm:$0xf]
        %v359 = vld [vmem:[#allocation5 + $0x30] sm:$0xf]
        %v360 = vld [vmem:[#allocation5 + $0x34] sm:$0xf]
        %v361 = vld [vmem:[#allocation5 + $0x38] sm:$0xf]
        %v362 = vld [vmem:[#allocation5 + $0x3c] sm:$0xf]
        %v363 = vld [vmem:[%s2] sm:$0x1]
        %v365 = vperm.slane %v363, 0
        %v383 = vunpack.c.l.b16 %v347
        %v384 = vunpack.c.l.b16 %v348
        %v385 = vunpack.c.l.b16 %v349
        %v386 = vunpack.c.l.b16 %v350
        %v387 = vunpack.c.l.b16 %v351
        %v388 = vunpack.c.l.b16 %v352
        %v389 = vunpack.c.l.b16 %v353
        %v390 = vunpack.c.l.b16 %v354
        %v391 = vunpack.c.l.b16 %v355
        %v392 = vunpack.c.l.b16 %v356
        %v393 = vunpack.c.l.b16 %v357
        %v394 = vunpack.c.l.b16 %v358
        %v395 = vunpack.c.l.b16 %v359
        %v396 = vunpack.c.l.b16 %v360
        %v397 = vunpack.c.l.b16 %v361
        %v398 = vunpack.c.l.b16 %v362
        %v399 = vpack.c.b16 %v384, %v383
        %v400 = vpack.c.b16 %v386, %v385
        %v401 = vpack.c.b16 %v388, %v387
        %v402 = vpack.c.b16 %v390, %v389
        %v403 = vpack.c.b16 %v392, %v391
        %v404 = vpack.c.b16 %v394, %v393
        %v405 = vpack.c.b16 %v396, %v395
        %v406 = vpack.c.b16 %v398, %v397
        %415 = vmatpush.bf16.msra.mxu0 %v406
        %416 = vmatpush.bf16.msra.mxu0 %v405
        %417 = vmatpush.bf16.msra.mxu0 %v404
        %418 = vmatpush.bf16.msra.mxu0 %v403
        %419 = vmatpush.bf16.msra.mxu0 %v402
        %420 = vmatpush.bf16.msra.mxu0 %v401
        %421 = vmatpush.bf16.msra.mxu0 %v400
        %422 = vmatpush.bf16.msra.mxu0 %v399
        %423 = vmatmul.bf16.gmra.mxu0 %v346
        %v424 = vpop.f32.mrf.mxu0
        %v425 = vadd.f32 %v365, %v424
        %v426 = vpop.f32.mrf.mxu0
        %427 = vdwg.mxu0
        %v428 = vmax.f32 %v425, 0.0
        %v429 = vld [vmem:[#allocation7] sm:$0xf]
        %v430 = vld [vmem:[#allocation7 + $0x4] sm:$0xf]
        %v431 = vld [vmem:[#allocation7 + $0x8] sm:$0xf]
        %v432 = vld [vmem:[#allocation7 + $0xc] sm:$0xf]
        %v433 = vld [vmem:[#allocation7 + $0x10] sm:$0xf]
        %v434 = vld [vmem:[#allocation7 + $0x14] sm:$0xf]
        %v435 = vld [vmem:[#allocation7 + $0x18] sm:$0xf]
        %v436 = vld [vmem:[#allocation7 + $0x1c] sm:$0xf]
        %v437 = vld [vmem:[#allocation7 + $0x20] sm:$0xf]
        %v438 = vld [vmem:[#allocation7 + $0x24] sm:$0xf]
        %v439 = vld [vmem:[#allocation7 + $0x28] sm:$0xf]
        %v440 = vld [vmem:[#allocation7 + $0x2c] sm:$0xf]
        %v441 = vld [vmem:[#allocation7 + $0x30] sm:$0xf]
        %v442 = vld [vmem:[#allocation7 + $0x34] sm:$0xf]
        %v443 = vld [vmem:[#allocation7 + $0x38] sm:$0xf]
        %v444 = vld [vmem:[#allocation7 + $0x3c] sm:$0xf]
        %v445 = vld [vmem:[%s4] sm:$0x1]
        %v446 = vpack.c.bf16 %v428, %v428
        %v448 = vperm.slane %v445, 0
        %v466 = vunpack.c.l.b16 %v429
        %v467 = vunpack.c.l.b16 %v430
        %v468 = vunpack.c.l.b16 %v431
        %v469 = vunpack.c.l.b16 %v432
        %v470 = vunpack.c.l.b16 %v433
        %v471 = vunpack.c.l.b16 %v434
        %v472 = vunpack.c.l.b16 %v435
        %v473 = vunpack.c.l.b16 %v436
        %v474 = vunpack.c.l.b16 %v437
        %v475 = vunpack.c.l.b16 %v438
        %v476 = vunpack.c.l.b16 %v439
        %v477 = vunpack.c.l.b16 %v440
        %v478 = vunpack.c.l.b16 %v441
        %v479 = vunpack.c.l.b16 %v442
        %v480 = vunpack.c.l.b16 %v443
        %v481 = vunpack.c.l.b16 %v444
        %v482 = vpack.c.b16 %v467, %v466
        %v483 = vpack.c.b16 %v469, %v468
        %v484 = vpack.c.b16 %v471, %v470
        %v485 = vpack.c.b16 %v473, %v472
        %v486 = vpack.c.b16 %v475, %v474
        %v487 = vpack.c.b16 %v477, %v476
        %v488 = vpack.c.b16 %v479, %v478
        %v489 = vpack.c.b16 %v481, %v480
        %498 = vmatpush.bf16.msra.mxu0 %v489
        %499 = vmatpush.bf16.msra.mxu0 %v488
        %500 = vmatpush.bf16.msra.mxu0 %v487
        %501 = vmatpush.bf16.msra.mxu0 %v486
        %502 = vmatpush.bf16.msra.mxu0 %v485
        %503 = vmatpush.bf16.msra.mxu0 %v484
        %504 = vmatpush.bf16.msra.mxu0 %v483
        %505 = vmatpush.bf16.msra.mxu0 %v482
        %506 = vmatmul.bf16.gmra.mxu0 %v446
        %v507 = vpop.f32.mrf.mxu0
        %v508 = vadd.f32 %v448, %v507
        %v509 = vpop.f32.mrf.mxu0
        %510 = vdwg.mxu0
        %v511 = vmax.f32 %v508, 0.0
        %v512 = vld [vmem:[#allocation8] sm:$0xf]
        %v513 = vld [vmem:[#allocation8 + $0x4] sm:$0xf]
        %v514 = vld [vmem:[#allocation8 + $0x8] sm:$0xf]
        %v515 = vld [vmem:[#allocation8 + $0xc] sm:$0xf]
        %v516 = vld [vmem:[#allocation8 + $0x10] sm:$0xf]
        %v517 = vld [vmem:[#allocation8 + $0x14] sm:$0xf]
        %v518 = vld [vmem:[#allocation8 + $0x18] sm:$0xf]
        %v519 = vld [vmem:[#allocation8 + $0x1c] sm:$0xf]
        %v520 = vld [vmem:[#allocation8 + $0x20] sm:$0xf]
        %v521 = vld [vmem:[#allocation8 + $0x24] sm:$0xf]
        %v522 = vld [vmem:[#allocation8 + $0x28] sm:$0xf]
        %v523 = vld [vmem:[#allocation8 + $0x2c] sm:$0xf]
        %v524 = vld [vmem:[#allocation8 + $0x30] sm:$0xf]
        %v525 = vld [vmem:[#allocation8 + $0x34] sm:$0xf]
        %v526 = vld [vmem:[#allocation8 + $0x38] sm:$0xf]
        %v527 = vld [vmem:[#allocation8 + $0x3c] sm:$0xf]
        %v528 = vld [vmem:[%s6] sm:$0x1]
        %v529 = vpack.c.bf16 %v511, %v511
        %v531 = vperm.slane %v528, 0
        %v549 = vunpack.c.l.b16 %v512
        %v550 = vunpack.c.l.b16 %v513
        %v551 = vunpack.c.l.b16 %v514
        %v552 = vunpack.c.l.b16 %v515
        %v553 = vunpack.c.l.b16 %v516
        %v554 = vunpack.c.l.b16 %v517
        %v555 = vunpack.c.l.b16 %v518
        %v556 = vunpack.c.l.b16 %v519
        %v557 = vunpack.c.l.b16 %v520
        %v558 = vunpack.c.l.b16 %v521
        %v559 = vunpack.c.l.b16 %v522
        %v560 = vunpack.c.l.b16 %v523
        %v561 = vunpack.c.l.b16 %v524
        %v562 = vunpack.c.l.b16 %v525
        %v563 = vunpack.c.l.b16 %v526
        %v564 = vunpack.c.l.b16 %v527
        %v565 = vpack.c.b16 %v550, %v549
        %v566 = vpack.c.b16 %v552, %v551
        %v567 = vpack.c.b16 %v554, %v553
        %v568 = vpack.c.b16 %v556, %v555
        %v569 = vpack.c.b16 %v558, %v557
        %v570 = vpack.c.b16 %v560, %v559
        %v571 = vpack.c.b16 %v562, %v561
        %v572 = vpack.c.b16 %v564, %v563
        %581 = vmatpush.bf16.msra.mxu0 %v572
        %582 = vmatpush.bf16.msra.mxu0 %v571
        %583 = vmatpush.bf16.msra.mxu0 %v570
        %584 = vmatpush.bf16.msra.mxu0 %v569
        %585 = vmatpush.bf16.msra.mxu0 %v568
        %586 = vmatpush.bf16.msra.mxu0 %v567
        %587 = vmatpush.bf16.msra.mxu0 %v566
        %588 = vmatpush.bf16.msra.mxu0 %v565
        %589 = vmatmul.bf16.gmra.mxu0 %v529
        %v590 = vpop.f32.mrf.mxu0
        %v591 = vadd.f32 %v531, %v590
        %v592 = vpop.f32.mrf.mxu0
        %593 = vdwg.mxu0
        %594 = vmax.xlane.f32.xlu0 %v591
        %v595 = vpop.xlane.xlu0 %594
        %v596 = vsub.f32 %v591, %v595
        %v597 = vmul.f32 %v596, 1.442695
        %v598 = vpow.pop %v597
        %599 = vadd.xlane.f32.xlu0 %v598
        %v600 = vpop.xlane.xlu0 %599
        %v601 = vlog2.pop %v600
        %v602 = vmul.f32 %v601, 0.6931472
        %v603 = vsub.f32 %v596, %v602
        %604 = vst [vmem:[%s345] sm:$0xff] %v603
        %s605 = sand.u32 %s186, 1
        %s606 = scalar_lea.sflag [#allocation4], %s605
        %s607 = sand.u32 %s186, 1
        %s608 = smul.addr %s607, 8
        %s609 = scalar_lea.vmem [#allocation10], %s608
        // Predicated region
        $region65: #{tpu_custom_call.1} parent=47 // pred_check
          %p610 = pneg %p196
        $region66: #{tpu_custom_call.1} parent=47 // pred_check_branch
          %612 = sbr.rel (%p610) target = $region68
        $region67: #{tpu_custom_call.1} parent=47 // pred_region
          %614 = vsyncadd %s606, 0
          %s615 = smul.addr %s26, 8
          %s616 = scalar_lea.hbm %s7, %s615
          %s618 = sshll.u32 %s609, 4
          %s619 = int_to_ptr.vmem [resolvable:$true] %s618
          %s620 = sshll.u32 %s616, 4
          %s621 = int_to_ptr.hbm [resolvable:$true] %s620
          %623 = dma.vmem_to_hbm [thread:$0]  %s619, 128, %s621, %s606
        $region68: #{tpu_custom_call.1} parent=47 // pred_fallthru
          _
      $region48: #{tpu_custom_call.1} parent=5 // pred_fallthru
        _
      %p624 = scmp.le.s32.totalorder 2, %s21
      // Predicated region
      $region69: #{tpu_custom_call.1} parent=5 // pred_check
        %p625 = pneg %p624
      $region70: #{tpu_custom_call.1} parent=5 // pred_check_branch
        %627 = sbr.rel (%p625) target = $region72
      $region71: #{tpu_custom_call.1} parent=5 // pred_region
        %s628 = ssub.s32 %s21, 2
        // Predicated region
        $region73: #{tpu_custom_call.1} parent=71 // pred_check
          %p629 = pneg %p202
        $region74: #{tpu_custom_call.1} parent=71 // pred_check_branch
          %631 = sbr.rel (%p629) target = $region76
        $region75: #{tpu_custom_call.1} parent=71 // pred_region
          %s632 = sand.u32 %s187, 1
          %s633 = scalar_lea.sflag [#allocation4], %s632
          %s634 = sand.u32 %s187, 1
          %s635 = smul.addr %s634, 8
          %s636 = scalar_lea.vmem [#allocation10], %s635
          %638 = dma.done %s633, 128
        $region76: #{tpu_custom_call.1} parent=71 // pred_fallthru
          _
      $region72: #{tpu_custom_call.1} parent=5 // pred_fallthru
        _
    $region6: #{tpu_custom_call.1} parent=1 // loop_footer
      %s25 = sadd.s32 1, %s21
    $region7: #{tpu_custom_call.1} parent=1 // loop_footer_branch
      %20 = sbr.rel target = $region3
    $region8: #{tpu_custom_call.1} parent=1 // loop_exit
      _
    %639 = vsyncpa [#allocation3], 1
    %s640 = scalar_lea.sflag [#allocation3], 1
    %641 = vsyncpa %s640, 1
    %642 = vsyncpa [#allocation6], 1
    %643 = vsyncpa [#allocation9], 1
    %644 = vsyncpa [#allocation4], 1
    %s645 = scalar_lea.sflag [#allocation4], 1
    %646 = vsyncpa %s645, 1

</llo_original>
